<compile_context>
chip_gen: v5e
topology: v5e:2x2
jax: 0.10.0
libtpu: 0.0.40
codegen_flags: <defaults>
</compile_context>

<pallas_src>
import jax
import jax.numpy as jnp
from jax.experimental import pallas as pl
from jax.experimental.pallas import tpu as pltpu

NUM_CLASSES = 10
FEATURE_DIM = 512
CLASS_PAD = 128          # lane-dense FC output: last dim padded to 128


def _round_up(x, m):
    return (x + m - 1) // m * m


def _pick_tile_k(F):
    """Return (tile_k, f_pad).  Prefer an exact divisor of F so the activations
    need no K-dim zero-pad copy (for CLIP F=150528, 3072 divides exactly)."""
    f128 = _round_up(F, 128)
    if f128 <= 3072:
        # Small feature dim: single K step (no per-step grid overhead).
        return f128, f128
    if F % 128 == 0:
        for cand in (3072, 2048, 1536, 1024, 512, 256, 128):
            if F % cand == 0:
                return cand, F            # no K padding needed at all
    # Fallback: minimal padding to a 2048-wide K tile.
    return 2048, _round_up(F, 2048)


def _pick_tile_b(B):
    """Return (tile_b, b_pad)."""
    if B < 64:
        # bf16 packs 16 rows per vreg; tiny batches: one tile, no pipelining.
        tb = _round_up(B, 16)
        return tb, tb
    b_pad = _round_up(B, 128)
    # 512-row tiles put the encoder matmul above the HBM ridge (w_enc is
    # re-streamed only once per 512 rows) while keeping VMEM use ~14-21 MiB.
    tile_b = min(512, b_pad)
    if b_pad // tile_b < 2 and b_pad >= 256:
        half = b_pad // 2
        if half % 128 == 0:
            tile_b = half                 # >= 2 batch tiles: feed both v7x TCs
    return tile_b, b_pad


# ---------------------------------------------------------------------------
# Fused kernel:
#   x (Bp, Fp) bf16  @  w_enc (Fp, 512) bf16   --K-tiled-->  f32 acc in VMEM
#   acc -> bf16 "features" (the .half() rounding)
#   features @ w_fc (512, 128) bf16  + b_fc (1, 128) f32  ->  logits (Bp, 128) f32
# ---------------------------------------------------------------------------
def _clip_fused_kernel(x_ref, w_enc_ref, w_fc_ref, b_fc_ref, o_ref, acc_ref):
    k = pl.program_id(1)

    @pl.when(k == 0)
    def _init():
        acc_ref[...] = jnp.zeros_like(acc_ref)

    # Frozen encoder stand-in: accumulate partial products over K tiles (MXU).
    acc_ref[...] += jnp.dot(
        x_ref[...], w_enc_ref[...], preferred_element_type=jnp.float32
    )

    @pl.when(k == pl.num_programs(1) - 1)
    def _finalize():
        # .half() rounding of the frozen features, then the FC head with bf16
        # inputs / f32 accumulation — features never leave VMEM.
        feats = acc_ref[...].astype(jnp.bfloat16)
        o_ref[...] = (
            jnp.dot(feats, w_fc_ref[...], preferred_element_type=jnp.float32)
            + b_fc_ref[...]
        )


def _clip_fused_call(x_p, w_enc_p, w_fc_p, b_fc_p, *, tile_b, tile_k):
    b_pad, f_pad = x_p.shape
    grid = (b_pad // tile_b, f_pad // tile_k)
    n_b_tiles = grid[0]

    flops = 2 * b_pad * f_pad * FEATURE_DIM + 2 * b_pad * FEATURE_DIM * CLASS_PAD
    # w_enc / w_fc / b_fc are re-streamed once per batch tile.
    bytes_accessed = (
        x_p.size * 2
        + w_enc_p.size * 2 * n_b_tiles
        + w_fc_p.size * 2 * n_b_tiles
        + b_fc_p.size * 4 * n_b_tiles
        + b_pad * CLASS_PAD * 4
    )

    # Double-buffered working set; cap at 48 MiB (safe on v7x's 64 MiB VMEM).
    vmem_need = (
        2 * (tile_b * tile_k * 2 + tile_k * FEATURE_DIM * 2)   # x, w_enc blocks
        + FEATURE_DIM * CLASS_PAD * 2 + CLASS_PAD * 4          # w_fc, b_fc
        + 2 * tile_b * CLASS_PAD * 4                           # out block
        + tile_b * FEATURE_DIM * 4                             # f32 accumulator
    )
    vmem_limit = min(max(int(vmem_need * 1.25), 32 * 1024 * 1024),
                     48 * 1024 * 1024)

    return pl.pallas_call(
        _clip_fused_kernel,
        out_shape=jax.ShapeDtypeStruct((b_pad, CLASS_PAD), jnp.float32),
        grid_spec=pltpu.PrefetchScalarGridSpec(
            num_scalar_prefetch=0,
            grid=grid,
            in_specs=[
                pl.BlockSpec((tile_b, tile_k), lambda i, k: (i, k)),
                pl.BlockSpec((tile_k, FEATURE_DIM), lambda i, k: (k, 0)),
                pl.BlockSpec((FEATURE_DIM, CLASS_PAD), lambda i, k: (0, 0)),
                pl.BlockSpec((1, CLASS_PAD), lambda i, k: (0, 0)),
            ],
            out_specs=pl.BlockSpec((tile_b, CLASS_PAD), lambda i, k: (i, 0)),
            scratch_shapes=[pltpu.VMEM((tile_b, FEATURE_DIM), jnp.float32)],
        ),
        compiler_params=pltpu.CompilerParams(
            dimension_semantics=("parallel", "arbitrary"),
            vmem_limit_bytes=vmem_limit,
        ),
        cost_estimate=pl.CostEstimate(
            flops=flops, transcendentals=0, bytes_accessed=bytes_accessed
        ),
    )(x_p, w_enc_p, w_fc_p, b_fc_p)


def prepare_params(params, in_features):
    """One-time padding / casting of the parameters (hoisted out of forward)."""
    tile_k, f_pad = _pick_tile_k(in_features)
    del tile_k
    w_enc_p = params["w_enc"].astype(jnp.bfloat16)          # (F, 512) frozen
    if f_pad != in_features:
        w_enc_p = jnp.pad(w_enc_p, ((0, f_pad - in_features), (0, 0)))
    # FC head: zero-pad classes to a full 128-lane output (padded logits are
    # exactly 0 and get sliced off in forward); bf16 matmul inputs, f32 bias.
    w_fc_p = (
        jnp.zeros((FEATURE_DIM, CLASS_PAD), jnp.float32)
        .at[:, :NUM_CLASSES].set(params["w_fc"])
        .astype(jnp.bfloat16)
    )
    b_fc_p = (
        jnp.zeros((1, CLASS_PAD), jnp.float32)
        .at[0, :NUM_CLASSES].set(params["b_fc"])
    )
    return {"w_enc": w_enc_p, "w_fc": w_fc_p, "b_fc": b_fc_p}


def clip_classifier_forward(images, prepared):
    """images: (B, C, H, W) float32 NCHW, exactly like the PyTorch module.
    `prepared` are the one-time-padded params from prepare_params()."""
    B = images.shape[0]
    # images.half()  (bfloat16 on TPU) + flatten for the stand-in encoder.
    x_flat = images.astype(jnp.bfloat16).reshape(B, -1)
    F = x_flat.shape[1]

    tile_k, f_pad = _pick_tile_k(F)
    tile_b, b_pad = _pick_tile_b(B)
    assert prepared["w_enc"].shape == (f_pad, FEATURE_DIM), (
        "prepare_params was called with a different in_features")

    # Only a cheap row pad of the batch dim (and K pad only when F has no
    # usable 128-multiple divisor — never for real CLIP inputs).
    if (b_pad, f_pad) != (B, F):
        x_flat = jnp.pad(x_flat, ((0, b_pad - B), (0, f_pad - F)))

    # with torch.no_grad(): encoder is frozen.
    # TODO(synk): forward-only fused kernel (no custom VJP); the frozen encoder
    #             matches torch's no_grad semantics for inference.
    logits_pad = _clip_fused_call(
        x_flat, prepared["w_enc"], prepared["w_fc"], prepared["b_fc"],
        tile_b=tile_b, tile_k=tile_k,
    )
    return logits_pad[:B, :NUM_CLASSES]


def init_params(key, in_features):
    k1, k2, k3 = jax.random.split(key, 3)
    # Frozen encoder stand-in weights (deterministic).
    w_enc = (jax.random.normal(k1, (in_features, FEATURE_DIM), jnp.float32)
             * (1.0 / jnp.sqrt(in_features)))
    # nn.Linear(512, num_classes): uniform(-1/sqrt(512), 1/sqrt(512)) init.
    bound = 1.0 / jnp.sqrt(jnp.float32(FEATURE_DIM))
    w_fc = jax.random.uniform(
        k2, (FEATURE_DIM, NUM_CLASSES), jnp.float32, -bound, bound)
    b_fc = jax.random.uniform(
        k3, (NUM_CLASSES,), jnp.float32, -bound, bound)
    return {"w_enc": w_enc, "w_fc": w_fc, "b_fc": b_fc}


if __name__ == "__main__":
    key = jax.random.PRNGKey(0)
    k_img, k_par = jax.random.split(key)

    # Small, CLIP-consistent shapes: batch=2, 3-channel 16x16 images (NCHW).
    B, C, H, W = 2, 3, 16, 16
    images = jax.random.normal(k_img, (B, C, H, W), jnp.float32)
    params = init_params(k_par, C * H * W)
    prepared = prepare_params(params, C * H * W)     # one-time pad/cast

    logits = jax.jit(clip_classifier_forward)(images, prepared)
    logits = jax.block_until_ready(logits)

    # Pure-JAX reference with the same dtype contract (bf16 features -> f32 FC).
    x_ref = images.astype(jnp.bfloat16).reshape(B, -1)
    feats_ref = jnp.dot(
        x_ref.astype(jnp.float32),
        params["w_enc"].astype(jnp.bfloat16).astype(jnp.float32),
        precision=jax.lax.Precision.HIGHEST,
    ).astype(jnp.bfloat16)
    logits_ref = jnp.dot(
        feats_ref.astype(jnp.float32),
        params["w_fc"].astype(jnp.bfloat16).astype(jnp.float32),
        precision=jax.lax.Precision.HIGHEST,
    ) + params["b_fc"]

    assert logits.shape == (B, NUM_CLASSES) and logits.dtype == jnp.float32
    assert jnp.allclose(logits, logits_ref, rtol=5e-2, atol=5e-2)
    print("KERNEL_OK")
</pallas_src>

<mosaic_0001>
module attributes {stable_mosaic.version = 11 : i64} {
  func.func @_clip_fused_kernel(%arg0: i32, %arg1: i32, %arg2: memref<16x768xbf16, #tpu.memory_space<vmem>>, %arg3: memref<768x512xbf16, #tpu.memory_space<vmem>>, %arg4: memref<512x128xbf16, #tpu.memory_space<vmem>>, %arg5: memref<1x128xf32, #tpu.memory_space<vmem>>, %arg6: memref<16x128xf32, #tpu.memory_space<vmem>>, %arg7: memref<16x512xf32, #tpu.memory_space<vmem>>) attributes {dimension_semantics = [#tpu.dimension_semantics<parallel>, #tpu.dimension_semantics<arbitrary>], iteration_bounds = array<i64: 1, 1>, scalar_prefetch = 0 : i64, scratch_operands = 1 : i64, tpu.core_type = #tpu.core_type<tc>, window_params = [{transform_indices = @transform_0, window_bounds = array<i64: 16, 768>}, {transform_indices = @transform_1, window_bounds = array<i64: 768, 512>}, {pipeline_mode = #tpu.pipeline_mode<synchronous>, transform_indices = @transform_2, window_bounds = array<i64: 512, 128>}, {pipeline_mode = #tpu.pipeline_mode<synchronous>, transform_indices = @transform_3, window_bounds = array<i64: 1, 128>}, {transform_indices = @transform_4, window_bounds = array<i64: 16, 128>}]} {
    %c0_i32 = arith.constant 0 : i32
    %0 = arith.cmpi eq, %arg1, %c0_i32 : i32
    %1 = arith.extui %0 : i1 to i32
    %c0_i32_0 = arith.constant 0 : i32
    %2 = arith.cmpi ne, %1, %c0_i32_0 : i32
    scf.if %2 {
      %cst_10 = arith.constant 0.000000e+00 : f32
      %12 = vector.broadcast %cst_10 : f32 to vector<16x512xf32>
      %c0_11 = arith.constant 0 : index
      %c0_12 = arith.constant 0 : index
      %13 = vector.load %arg7[%c0_11, %c0_12] : memref<16x512xf32, #tpu.memory_space<vmem>>, vector<16x512xf32>
      tpu.vector_store %arg7[%c0_11, %c0_12], %12 {strides = array<i32>} : memref<16x512xf32, #tpu.memory_space<vmem>>, vector<16x512xf32>,
    } else {
    }
    %c0 = arith.constant 0 : index
    %c0_1 = arith.constant 0 : index
    %3 = vector.load %arg7[%c0, %c0_1] : memref<16x512xf32, #tpu.memory_space<vmem>>, vector<16x512xf32>
    %c0_2 = arith.constant 0 : index
    %c0_3 = arith.constant 0 : index
    %4 = vector.load %arg2[%c0_2, %c0_3] : memref<16x768xbf16, #tpu.memory_space<vmem>>, vector<16x768xbf16>
    %c0_4 = arith.constant 0 : index
    %c0_5 = arith.constant 0 : index
    %5 = vector.load %arg3[%c0_4, %c0_5] : memref<768x512xbf16, #tpu.memory_space<vmem>>, vector<768x512xbf16>
    %cst = arith.constant dense<0.000000e+00> : vector<16x512xf32>
    %6 = tpu.matmul %4, %5, %cst {dimension_numbers = #tpu.dot_dimension_numbers<[1], [0], [0], [1], [0, 0, 1, 1], [], []>} : vector<16x768xbf16>, vector<768x512xbf16>, vector<16x512xf32> -> vector<16x512xf32>
    %7 = arith.addf %3, %6 : vector<16x512xf32>
    %c0_6 = arith.constant 0 : index
    %c0_7 = arith.constant 0 : index
    %8 = vector.load %arg7[%c0_6, %c0_7] : memref<16x512xf32, #tpu.memory_space<vmem>>, vector<16x512xf32>
    tpu.vector_store %arg7[%c0_6, %c0_7], %7 {strides = array<i32>} : memref<16x512xf32, #tpu.memory_space<vmem>>, vector<16x512xf32>,
    %c0_i32_8 = arith.constant 0 : i32
    %9 = arith.cmpi eq, %arg1, %c0_i32_8 : i32
    %10 = arith.extui %9 : i1 to i32
    %c0_i32_9 = arith.constant 0 : i32
    %11 = arith.cmpi ne, %10, %c0_i32_9 : i32
    scf.if %11 {
      %c0_10 = arith.constant 0 : index
      %c0_11 = arith.constant 0 : index
      %12 = vector.load %arg7[%c0_10, %c0_11] : memref<16x512xf32, #tpu.memory_space<vmem>>, vector<16x512xf32>
      %13 = arith.truncf %12 : vector<16x512xf32> to vector<16x512xbf16>
      %c0_12 = arith.constant 0 : index
      %c0_13 = arith.constant 0 : index
      %14 = vector.load %arg4[%c0_12, %c0_13] : memref<512x128xbf16, #tpu.memory_space<vmem>>, vector<512x128xbf16>
      %cst_14 = arith.constant dense<0.000000e+00> : vector<16x128xf32>
      %15 = tpu.matmul %13, %14, %cst_14 {dimension_numbers = #tpu.dot_dimension_numbers<[1], [0], [0], [1], [0, 0, 1, 1], [], []>} : vector<16x512xbf16>, vector<512x128xbf16>, vector<16x128xf32> -> vector<16x128xf32>
      %c0_15 = arith.constant 0 : index
      %c0_16 = arith.constant 0 : index
      %16 = vector.load %arg5[%c0_15, %c0_16] : memref<1x128xf32, #tpu.memory_space<vmem>>, vector<1x128xf32>
      %17 = vector.broadcast %16 : vector<1x128xf32> to vector<16x128xf32>
      %18 = arith.addf %15, %17 : vector<16x128xf32>
      %c0_17 = arith.constant 0 : index
      %c0_18 = arith.constant 0 : index
      %19 = vector.load %arg6[%c0_17, %c0_18] : memref<16x128xf32, #tpu.memory_space<vmem>>, vector<16x128xf32>
      tpu.vector_store %arg6[%c0_17, %c0_18], %18 {strides = array<i32>} : memref<16x128xf32, #tpu.memory_space<vmem>>, vector<16x128xf32>,
    } else {
    }
    return
  }
  func.func @transform_0(%arg0: i32, %arg1: i32) -> (i32, i32) {
    %c0_i32 = arith.constant 0 : i32
    return %arg0, %arg1 : i32, i32
  }
  func.func @transform_1(%arg0: i32, %arg1: i32) -> (i32, i32) {
    %c0_i32 = arith.constant 0 : i32
    %c0_i32_0 = arith.constant 0 : i32
    return %arg1, %c0_i32 : i32, i32
  }
  func.func @transform_2(%arg0: i32, %arg1: i32) -> (i32, i32) {
    %c0_i32 = arith.constant 0 : i32
    %c0_i32_0 = arith.constant 0 : i32
    %c0_i32_1 = arith.constant 0 : i32
    return %c0_i32, %c0_i32_0 : i32, i32
  }
  func.func @transform_3(%arg0: i32, %arg1: i32) -> (i32, i32) {
    %c0_i32 = arith.constant 0 : i32
    %c0_i32_0 = arith.constant 0 : i32
    %c0_i32_1 = arith.constant 0 : i32
    return %c0_i32, %c0_i32_0 : i32, i32
  }
  func.func @transform_4(%arg0: i32, %arg1: i32) -> (i32, i32) {
    %c0_i32 = arith.constant 0 : i32
    %c0_i32_0 = arith.constant 0 : i32
    return %arg0, %c0_i32 : i32, i32
  }
}

</mosaic_0001>

<llo_original>
// kernel: clip_classifier_forward.1
$region0: #{clip_classifier_forward.1}
  #allocation0 [shape = 'u32[]', space=smem, size = 0x4, offset = 0x4, fixed_abs, tag = 'smem constant byte address 0x4 - core index']
  #allocation1 [shape = 'u32[72,128]{1,0:T(1,128)}', space=vmem, size = 0x9000, scoped, tag = 'internal scratch']
  #allocation2 [shape = 'f32[16,512]{1,0:T(8,128)}', space=vmem, size = 0x8000, scoped, tag = 'scratch operand']
  %s0 = inlined_call_operand.vmem [shape: bf16[16,768], index: 0, kind: input, shape index: {}]
  %s1 = inlined_call_operand.hbm [shape: bf16[768,512], index: 1, kind: input, shape index: {}]
  %s2 = inlined_call_operand.hbm [shape: bf16[512,128], index: 2, kind: input, shape index: {}]
  %s3 = inlined_call_operand.vmem [shape: f32[1,128], index: 3, kind: input, shape index: {}]
  %s4 = inlined_call_operand.vmem [shape: f32[16,128], index: 4, kind: output, shape index: {}]
  %s5 = sld [smem:[#allocation0]]
  $region42: #{clip_classifier_forward.1} parent=0
    _
  %s7 = ssub.s32 1, %s5
  %s8 = scalar_select 0, %s7, %s5
  $region1: #{clip_classifier_forward.1} parent=0
    #allocation3 [shape = 'u8[786432]{0}', space=vmem, size = 0xc0000, scoped, tag = 'input window, operand 1, single buffered']
    #allocation4 [shape = 's32[1]{0}', space=sflag, size = 0x4, scoped, tag = 'scoped memory for clip_classifier_forward.1']
    #allocation5 [shape = 'u8[131072]{0}', space=vmem, size = 0x20000, scoped, tag = 'input window, operand 2, single buffered']
    #allocation6 [shape = 's32[1]{0}', space=sflag, size = 0x4, scoped, tag = 'scoped memory for clip_classifier_forward.1']
    %9 = vsyncpa [#allocation4], 0
    %10 = vsyncpa [#allocation6], 0
    // Predicated region
    $region2: #{clip_classifier_forward.1} parent=1 // pred_check
      _
    $region3: #{clip_classifier_forward.1} parent=1 // pred_check_branch
      %12 = sbr.rel (0) target = $region5
    $region4: #{clip_classifier_forward.1} parent=1 // pred_region
      _
    $region5: #{clip_classifier_forward.1} parent=1 // pred_fallthru
      _
    // Predicated region
    $region6: #{clip_classifier_forward.1} parent=1 // pred_check
      _
    $region7: #{clip_classifier_forward.1} parent=1 // pred_check_branch
      %14 = sbr.rel (0) target = $region9
    $region8: #{clip_classifier_forward.1} parent=1 // pred_region
      %16 = vsyncadd [#allocation4], 0
      %s17 = sshll.u32 %s1, 4
      %s18 = int_to_ptr.hbm [resolvable:$true] %s17
      %s19 = sshll.u32 [#allocation3], 4
      %s20 = int_to_ptr.vmem [resolvable:$true] %s19
      %25 = dma.hbm_to_vmem [thread:$0]  %s18, 24576, %s20, [#allocation4], 256, 256, 16
    $region9: #{clip_classifier_forward.1} parent=1 // pred_fallthru
      _
    // Predicated region
    $region10: #{clip_classifier_forward.1} parent=1 // pred_check
      _
    $region11: #{clip_classifier_forward.1} parent=1 // pred_check_branch
      %27 = sbr.rel (0) target = $region13
    $region12: #{clip_classifier_forward.1} parent=1 // pred_region
      %29 = vsyncadd [#allocation6], 0
      %s30 = sshll.u32 %s2, 4
      %s31 = int_to_ptr.hbm [resolvable:$true] %s30
      %s32 = sshll.u32 [#allocation5], 4
      %s33 = int_to_ptr.vmem [resolvable:$true] %s32
      %38 = dma.hbm_to_vmem [thread:$0]  %s31, 4096, %s33, [#allocation6], 64, 64, 4
    $region13: #{clip_classifier_forward.1} parent=1 // pred_fallthru
      _
    // Predicated region
    $region14: #{clip_classifier_forward.1} parent=1 // pred_check
      _
    $region15: #{clip_classifier_forward.1} parent=1 // pred_check_branch
      %40 = sbr.rel (0) target = $region17
    $region16: #{clip_classifier_forward.1} parent=1 // pred_region
      _
    $region17: #{clip_classifier_forward.1} parent=1 // pred_fallthru
      _
    // Predicated region
    $region18: #{clip_classifier_forward.1} parent=1 // pred_check
      _
    $region19: #{clip_classifier_forward.1} parent=1 // pred_check_branch
      %42 = sbr.rel (0) target = $region21
    $region20: #{clip_classifier_forward.1} parent=1 // pred_region
      %44 = dma.done [#allocation4], 24576
    $region21: #{clip_classifier_forward.1} parent=1 // pred_fallthru
      _
    // Predicated region
    $region22: #{clip_classifier_forward.1} parent=1 // pred_check
      _
    $region23: #{clip_classifier_forward.1} parent=1 // pred_check_branch
      %46 = sbr.rel (0) target = $region25
    $region24: #{clip_classifier_forward.1} parent=1 // pred_region
      %48 = dma.done [#allocation6], 4096
    $region25: #{clip_classifier_forward.1} parent=1 // pred_fallthru
      _
    %p49 = scmp.eq.s32.totalorder 0, 0
    // Predicated region
    $region26: #{clip_classifier_forward.1} parent=1 // pred_check
      %p50 = pneg %p49
    $region27: #{clip_classifier_forward.1} parent=1 // pred_check_branch
      %52 = sbr.rel (%p50) target = $region29
    $region28: #{clip_classifier_forward.1} parent=1 // pred_region
      %53 = vst [vmem:[#allocation2] sm:$0xff] 0.0
      %54 = vst [vmem:[#allocation2 + $0x8] sm:$0xff] 0.0
      %55 = vst [vmem:[#allocation2 + $0x10] sm:$0xff] 0.0
      %56 = vst [vmem:[#allocation2 + $0x18] sm:$0xff] 0.0
      %57 = vst [vmem:[#allocation2 + $0x20] sm:$0xff] 0.0
      %58 = vst [vmem:[#allocation2 + $0x28] sm:$0xff] 0.0
      %59 = vst [vmem:[#allocation2 + $0x30] sm:$0xff] 0.0
      %60 = vst [vmem:[#allocation2 + $0x38] sm:$0xff] 0.0
    $region29: #{clip_classifier_forward.1} parent=1 // pred_fallthru
      _
    %v61 = vld [vmem:[#allocation2] sm:$0xff]
    %v62 = vld [vmem:[#allocation2 + $0x8] sm:$0xff]
    %v63 = vld [vmem:[#allocation2 + $0x10] sm:$0xff]
    %v64 = vld [vmem:[#allocation2 + $0x18] sm:$0xff]
    %v65 = vld [vmem:[#allocation2 + $0x20] sm:$0xff]
    %v66 = vld [vmem:[#allocation2 + $0x28] sm:$0xff]
    %v67 = vld [vmem:[#allocation2 + $0x30] sm:$0xff]
    %v68 = vld [vmem:[#allocation2 + $0x38] sm:$0xff]
    %v69 = vld [vmem:[%s0] sm:$0xff]
    %v70 = vld [vmem:[%s0 + $0x8] sm:$0xff]
    %v71 = vld [vmem:[%s0 + $0x10] sm:$0xff]
    %v72 = vld [vmem:[%s0 + $0x18] sm:$0xff]
    %v73 = vld [vmem:[%s0 + $0x20] sm:$0xff]
    %v74 = vld [vmem:[%s0 + $0x28] sm:$0xff]
    %v75 = vld [vmem:[#allocation3] sm:$0xff]
    %v76 = vld [vmem:[#allocation3 + $0x8] sm:$0xff]
    %v77 = vld [vmem:[#allocation3 + $0x10] sm:$0xff]
    %v78 = vld [vmem:[#allocation3 + $0x18] sm:$0xff]
    %v79 = vld [vmem:[#allocation3 + $0x20] sm:$0xff]
    %v80 = vld [vmem:[#allocation3 + $0x28] sm:$0xff]
    %v81 = vld [vmem:[#allocation3 + $0x30] sm:$0xff]
    %v82 = vld [vmem:[#allocation3 + $0x38] sm:$0xff]
    %v83 = vld [vmem:[#allocation3 + $0x40] sm:$0xff]
    %v84 = vld [vmem:[#allocation3 + $0x48] sm:$0xff]
    %v85 = vld [vmem:[#allocation3 + $0x50] sm:$0xff]
    %v86 = vld [vmem:[#allocation3 + $0x58] sm:$0xff]
    %v87 = vld [vmem:[#allocation3 + $0x60] sm:$0xff]
    %v88 = vld [vmem:[#allocation3 + $0x68] sm:$0xff]
    %v89 = vld [vmem:[#allocation3 + $0x70] sm:$0xff]
    %v90 = vld [vmem:[#allocation3 + $0x78] sm:$0xff]
    %v91 = vld [vmem:[#allocation3 + $0x80] sm:$0xff]
    %v92 = vld [vmem:[#allocation3 + $0x88] sm:$0xff]
    %v93 = vld [vmem:[#allocation3 + $0x90] sm:$0xff]
    %v94 = vld [vmem:[#allocation3 + $0x98] sm:$0xff]
    %v95 = vld [vmem:[#allocation3 + $0xa0] sm:$0xff]
    %v96 = vld [vmem:[#allocation3 + $0xa8] sm:$0xff]
    %v97 = vld [vmem:[#allocation3 + $0xb0] sm:$0xff]
    %v98 = vld [vmem:[#allocation3 + $0xb8] sm:$0xff]
    %v99 = vld [vmem:[#allocation3 + $0xc0] sm:$0xff]
    %v100 = vld [vmem:[#allocation3 + $0xc8] sm:$0xff]
    %v101 = vld [vmem:[#allocation3 + $0xd0] sm:$0xff]
    %v102 = vld [vmem:[#allocation3 + $0xd8] sm:$0xff]
    %v103 = vld [vmem:[#allocation3 + $0xe0] sm:$0xff]
    %v104 = vld [vmem:[#allocation3 + $0xe8] sm:$0xff]
    %v105 = vld [vmem:[#allocation3 + $0xf0] sm:$0xff]
    %v106 = vld [vmem:[#allocation3 + $0xf8] sm:$0xff]
    %v107 = vld [vmem:[#allocation3 + $0x100] sm:$0xff]
    %v108 = vld [vmem:[#allocation3 + $0x108] sm:$0xff]
    %v109 = vld [vmem:[#allocation3 + $0x110] sm:$0xff]
    %v110 = vld [vmem:[#allocation3 + $0x118] sm:$0xff]
    %v111 = vld [vmem:[#allocation3 + $0x120] sm:$0xff]
    %v112 = vld [vmem:[#allocation3 + $0x128] sm:$0xff]
    %v113 = vld [vmem:[#allocation3 + $0x130] sm:$0xff]
    %v114 = vld [vmem:[#allocation3 + $0x138] sm:$0xff]
    %v115 = vld [vmem:[#allocation3 + $0x140] sm:$0xff]
    %v116 = vld [vmem:[#allocation3 + $0x148] sm:$0xff]
    %v117 = vld [vmem:[#allocation3 + $0x150] sm:$0xff]
    %v118 = vld [vmem:[#allocation3 + $0x158] sm:$0xff]
    %v119 = vld [vmem:[#allocation3 + $0x160] sm:$0xff]
    %v120 = vld [vmem:[#allocation3 + $0x168] sm:$0xff]
    %v121 = vld [vmem:[#allocation3 + $0x170] sm:$0xff]
    %v122 = vld [vmem:[#allocation3 + $0x178] sm:$0xff]
    %v123 = vld [vmem:[#allocation3 + $0x180] sm:$0xff]
    %v124 = vld [vmem:[#allocation3 + $0x188] sm:$0xff]
    %v125 = vld [vmem:[#allocation3 + $0x190] sm:$0xff]
    %v126 = vld [vmem:[#allocation3 + $0x198] sm:$0xff]
    %v127 = vld [vmem:[#allocation3 + $0x1a0] sm:$0xff]
    %v128 = vld [vmem:[#allocation3 + $0x1a8] sm:$0xff]
    %v129 = vld [vmem:[#allocation3 + $0x1b0] sm:$0xff]
    %v130 = vld [vmem:[#allocation3 + $0x1b8] sm:$0xff]
    %v131 = vld [vmem:[#allocation3 + $0x1c0] sm:$0xff]
    %v132 = vld [vmem:[#allocation3 + $0x1c8] sm:$0xff]
    %v133 = vld [vmem:[#allocation3 + $0x1d0] sm:$0xff]
    %v134 = vld [vmem:[#allocation3 + $0x1d8] sm:$0xff]
    %v135 = vld [vmem:[#allocation3 + $0x1e0] sm:$0xff]
    %v136 = vld [vmem:[#allocation3 + $0x1e8] sm:$0xff]
    %v137 = vld [vmem:[#allocation3 + $0x1f0] sm:$0xff]
    %v138 = vld [vmem:[#allocation3 + $0x1f8] sm:$0xff]
    %v139 = vld [vmem:[#allocation3 + $0x200] sm:$0xff]
    %v140 = vld [vmem:[#allocation3 + $0x208] sm:$0xff]
    %v141 = vld [vmem:[#allocation3 + $0x210] sm:$0xff]
    %v142 = vld [vmem:[#allocation3 + $0x218] sm:$0xff]
    %v143 = vld [vmem:[#allocation3 + $0x220] sm:$0xff]
    %v144 = vld [vmem:[#allocation3 + $0x228] sm:$0xff]
    %v145 = vld [vmem:[#allocation3 + $0x230] sm:$0xff]
    %v146 = vld [vmem:[#allocation3 + $0x238] sm:$0xff]
    %v147 = vld [vmem:[#allocation3 + $0x240] sm:$0xff]
    %v148 = vld [vmem:[#allocation3 + $0x248] sm:$0xff]
    %v149 = vld [vmem:[#allocation3 + $0x250] sm:$0xff]
    %v150 = vld [vmem:[#allocation3 + $0x258] sm:$0xff]
    %v151 = vld [vmem:[#allocation3 + $0x260] sm:$0xff]
    %v152 = vld [vmem:[#allocation3 + $0x268] sm:$0xff]
    %v153 = vld [vmem:[#allocation3 + $0x270] sm:$0xff]
    %v154 = vld [vmem:[#allocation3 + $0x278] sm:$0xff]
    %v155 = vld [vmem:[#allocation3 + $0x280] sm:$0xff]
    %v156 = vld [vmem:[#allocation3 + $0x288] sm:$0xff]
    %v157 = vld [vmem:[#allocation3 + $0x290] sm:$0xff]
    %v158 = vld [vmem:[#allocation3 + $0x298] sm:$0xff]
    %v159 = vld [vmem:[#allocation3 + $0x2a0] sm:$0xff]
    %v160 = vld [vmem:[#allocation3 + $0x2a8] sm:$0xff]
    %v161 = vld [vmem:[#allocation3 + $0x2b0] sm:$0xff]
    %v162 = vld [vmem:[#allocation3 + $0x2b8] sm:$0xff]
    %v163 = vld [vmem:[#allocation3 + $0x2c0] sm:$0xff]
    %v164 = vld [vmem:[#allocation3 + $0x2c8] sm:$0xff]
    %v165 = vld [vmem:[#allocation3 + $0x2d0] sm:$0xff]
    %v166 = vld [vmem:[#allocation3 + $0x2d8] sm:$0xff]
    %v167 = vld [vmem:[#allocation3 + $0x2e0] sm:$0xff]
    %v168 = vld [vmem:[#allocation3 + $0x2e8] sm:$0xff]
    %v169 = vld [vmem:[#allocation3 + $0x2f0] sm:$0xff]
    %v170 = vld [vmem:[#allocation3 + $0x2f8] sm:$0xff]
    %v171 = vld [vmem:[#allocation3 + $0x300] sm:$0xff]
    %v172 = vld [vmem:[#allocation3 + $0x308] sm:$0xff]
    %v173 = vld [vmem:[#allocation3 + $0x310] sm:$0xff]
    %v174 = vld [vmem:[#allocation3 + $0x318] sm:$0xff]
    %v175 = vld [vmem:[#allocation3 + $0x320] sm:$0xff]
    %v176 = vld [vmem:[#allocation3 + $0x328] sm:$0xff]
    %v177 = vld [vmem:[#allocation3 + $0x330] sm:$0xff]
    %v178 = vld [vmem:[#allocation3 + $0x338] sm:$0xff]
    %v179 = vld [vmem:[#allocation3 + $0x340] sm:$0xff]
    %v180 = vld [vmem:[#allocation3 + $0x348] sm:$0xff]
    %v181 = vld [vmem:[#allocation3 + $0x350] sm:$0xff]
    %v182 = vld [vmem:[#allocation3 + $0x358] sm:$0xff]
    %v183 = vld [vmem:[#allocation3 + $0x360] sm:$0xff]
    %v184 = vld [vmem:[#allocation3 + $0x368] sm:$0xff]
    %v185 = vld [vmem:[#allocation3 + $0x370] sm:$0xff]
    %v186 = vld [vmem:[#allocation3 + $0x378] sm:$0xff]
    %v187 = vld [vmem:[#allocation3 + $0x380] sm:$0xff]
    %v188 = vld [vmem:[#allocation3 + $0x388] sm:$0xff]
    %v189 = vld [vmem:[#allocation3 + $0x390] sm:$0xff]
    %v190 = vld [vmem:[#allocation3 + $0x398] sm:$0xff]
    %v191 = vld [vmem:[#allocation3 + $0x3a0] sm:$0xff]
    %v192 = vld [vmem:[#allocation3 + $0x3a8] sm:$0xff]
    %v193 = vld [vmem:[#allocation3 + $0x3b0] sm:$0xff]
    %v194 = vld [vmem:[#allocation3 + $0x3b8] sm:$0xff]
    %v195 = vld [vmem:[#allocation3 + $0x3c0] sm:$0xff]
    %v196 = vld [vmem:[#allocation3 + $0x3c8] sm:$0xff]
    %v197 = vld [vmem:[#allocation3 + $0x3d0] sm:$0xff]
    %v198 = vld [vmem:[#allocation3 + $0x3d8] sm:$0xff]
    %v199 = vld [vmem:[#allocation3 + $0x3e0] sm:$0xff]
    %v200 = vld [vmem:[#allocation3 + $0x3e8] sm:$0xff]
    %v201 = vld [vmem:[#allocation3 + $0x3f0] sm:$0xff]
    %v202 = vld [vmem:[#allocation3 + $0x3f8] sm:$0xff]
    %v203 = vld [vmem:[#allocation3 + $0x400] sm:$0xff]
    %v204 = vld [vmem:[#allocation3 + $0x408] sm:$0xff]
    %v205 = vld [vmem:[#allocation3 + $0x410] sm:$0xff]
    %v206 = vld [vmem:[#allocation3 + $0x418] sm:$0xff]
    %v207 = vld [vmem:[#allocation3 + $0x420] sm:$0xff]
    %v208 = vld [vmem:[#allocation3 + $0x428] sm:$0xff]
    %v209 = vld [vmem:[#allocation3 + $0x430] sm:$0xff]
    %v210 = vld [vmem:[#allocation3 + $0x438] sm:$0xff]
    %v211 = vld [vmem:[#allocation3 + $0x440] sm:$0xff]
    %v212 = vld [vmem:[#allocation3 + $0x448] sm:$0xff]
    %v213 = vld [vmem:[#allocation3 + $0x450] sm:$0xff]
    %v214 = vld [vmem:[#allocation3 + $0x458] sm:$0xff]
    %v215 = vld [vmem:[#allocation3 + $0x460] sm:$0xff]
    %v216 = vld [vmem:[#allocation3 + $0x468] sm:$0xff]
    %v217 = vld [vmem:[#allocation3 + $0x470] sm:$0xff]
    %v218 = vld [vmem:[#allocation3 + $0x478] sm:$0xff]
    %v219 = vld [vmem:[#allocation3 + $0x480] sm:$0xff]
    %v220 = vld [vmem:[#allocation3 + $0x488] sm:$0xff]
    %v221 = vld [vmem:[#allocation3 + $0x490] sm:$0xff]
    %v222 = vld [vmem:[#allocation3 + $0x498] sm:$0xff]
    %v223 = vld [vmem:[#allocation3 + $0x4a0] sm:$0xff]
    %v224 = vld [vmem:[#allocation3 + $0x4a8] sm:$0xff]
    %v225 = vld [vmem:[#allocation3 + $0x4b0] sm:$0xff]
    %v226 = vld [vmem:[#allocation3 + $0x4b8] sm:$0xff]
    %v227 = vld [vmem:[#allocation3 + $0x4c0] sm:$0xff]
    %v228 = vld [vmem:[#allocation3 + $0x4c8] sm:$0xff]
    %v229 = vld [vmem:[#allocation3 + $0x4d0] sm:$0xff]
    %v230 = vld [vmem:[#allocation3 + $0x4d8] sm:$0xff]
    %v231 = vld [vmem:[#allocation3 + $0x4e0] sm:$0xff]
    %v232 = vld [vmem:[#allocation3 + $0x4e8] sm:$0xff]
    %v233 = vld [vmem:[#allocation3 + $0x4f0] sm:$0xff]
    %v234 = vld [vmem:[#allocation3 + $0x4f8] sm:$0xff]
    %v235 = vld [vmem:[#allocation3 + $0x500] sm:$0xff]
    %v236 = vld [vmem:[#allocation3 + $0x508] sm:$0xff]
    %v237 = vld [vmem:[#allocation3 + $0x510] sm:$0xff]
    %v238 = vld [vmem:[#allocation3 + $0x518] sm:$0xff]
    %v239 = vld [vmem:[#allocation3 + $0x520] sm:$0xff]
    %v240 = vld [vmem:[#allocation3 + $0x528] sm:$0xff]
    %v241 = vld [vmem:[#allocation3 + $0x530] sm:$0xff]
    %v242 = vld [vmem:[#allocation3 + $0x538] sm:$0xff]
    %v243 = vld [vmem:[#allocation3 + $0x540] sm:$0xff]
    %v244 = vld [vmem:[#allocation3 + $0x548] sm:$0xff]
    %v245 = vld [vmem:[#allocation3 + $0x550] sm:$0xff]
    %v246 = vld [vmem:[#allocation3 + $0x558] sm:$0xff]
    %v247 = vld [vmem:[#allocation3 + $0x560] sm:$0xff]
    %v248 = vld [vmem:[#allocation3 + $0x568] sm:$0xff]
    %v249 = vld [vmem:[#allocation3 + $0x570] sm:$0xff]
    %v250 = vld [vmem:[#allocation3 + $0x578] sm:$0xff]
    %v251 = vld [vmem:[#allocation3 + $0x580] sm:$0xff]
    %v252 = vld [vmem:[#allocation3 + $0x588] sm:$0xff]
    %v253 = vld [vmem:[#allocation3 + $0x590] sm:$0xff]
    %v254 = vld [vmem:[#allocation3 + $0x598] sm:$0xff]
    %v255 = vld [vmem:[#allocation3 + $0x5a0] sm:$0xff]
    %v256 = vld [vmem:[#allocation3 + $0x5a8] sm:$0xff]
    %v257 = vld [vmem:[#allocation3 + $0x5b0] sm:$0xff]
    %v258 = vld [vmem:[#allocation3 + $0x5b8] sm:$0xff]
    %v259 = vld [vmem:[#allocation3 + $0x5c0] sm:$0xff]
    %v260 = vld [vmem:[#allocation3 + $0x5c8] sm:$0xff]
    %v261 = vld [vmem:[#allocation3 + $0x5d0] sm:$0xff]
    %v262 = vld [vmem:[#allocation3 + $0x5d8] sm:$0xff]
    %v263 = vld [vmem:[#allocation3 + $0x5e0] sm:$0xff]
    %v264 = vld [vmem:[#allocation3 + $0x5e8] sm:$0xff]
    %v265 = vld [vmem:[#allocation3 + $0x5f0] sm:$0xff]
    %v266 = vld [vmem:[#allocation3 + $0x5f8] sm:$0xff]
    %v273 = vunpack.c.l.b16 %v69
    %v274 = vunpack.c.h.b16 %v69
    %v275 = vunpack.c.l.b16 %v70
    %v276 = vunpack.c.h.b16 %v70
    %v277 = vunpack.c.l.b16 %v71
    %v278 = vunpack.c.h.b16 %v71
    %v279 = vunpack.c.l.b16 %v72
    %v280 = vunpack.c.h.b16 %v72
    %v281 = vunpack.c.l.b16 %v73
    %v282 = vunpack.c.h.b16 %v73
    %v283 = vunpack.c.l.b16 %v74
    %v284 = vunpack.c.h.b16 %v74
    %v285 = vpack.c.b16 %v279, %v273
    %v286 = vpack.c.b16 %v280, %v274
    %v287 = vpack.c.b16 %v281, %v275
    %v288 = vpack.c.b16 %v282, %v276
    %v289 = vpack.c.b16 %v283, %v277
    %v290 = vpack.c.b16 %v284, %v278
    %v489 = vunpack.c.l.b16 %v75
    %v490 = vunpack.c.h.b16 %v75
    %v491 = vunpack.c.l.b16 %v76
    %v492 = vunpack.c.h.b16 %v76
    %v493 = vunpack.c.l.b16 %v77
    %v494 = vunpack.c.h.b16 %v77
    %v495 = vunpack.c.l.b16 %v78
    %v496 = vunpack.c.h.b16 %v78
    %v497 = vunpack.c.l.b16 %v79
    %v498 = vunpack.c.h.b16 %v79
    %v499 = vunpack.c.l.b16 %v80
    %v500 = vunpack.c.h.b16 %v80
    %v501 = vunpack.c.l.b16 %v81
    %v502 = vunpack.c.h.b16 %v81
    %v503 = vunpack.c.l.b16 %v82
    %v504 = vunpack.c.h.b16 %v82
    %v505 = vunpack.c.l.b16 %v83
    %v506 = vunpack.c.h.b16 %v83
    %v507 = vunpack.c.l.b16 %v84
    %v508 = vunpack.c.h.b16 %v84
    %v509 = vunpack.c.l.b16 %v85
    %v510 = vunpack.c.h.b16 %v85
    %v511 = vunpack.c.l.b16 %v86
    %v512 = vunpack.c.h.b16 %v86
    %v513 = vunpack.c.l.b16 %v87
    %v514 = vunpack.c.h.b16 %v87
    %v515 = vunpack.c.l.b16 %v88
    %v516 = vunpack.c.h.b16 %v88
    %v517 = vunpack.c.l.b16 %v89
    %v518 = vunpack.c.h.b16 %v89
    %v519 = vunpack.c.l.b16 %v90
    %v520 = vunpack.c.h.b16 %v90
    %v521 = vunpack.c.l.b16 %v91
    %v522 = vunpack.c.h.b16 %v91
    %v523 = vunpack.c.l.b16 %v92
    %v524 = vunpack.c.h.b16 %v92
    %v525 = vunpack.c.l.b16 %v93
    %v526 = vunpack.c.h.b16 %v93
    %v527 = vunpack.c.l.b16 %v94
    %v528 = vunpack.c.h.b16 %v94
    %v529 = vunpack.c.l.b16 %v95
    %v530 = vunpack.c.h.b16 %v95
    %v531 = vunpack.c.l.b16 %v96
    %v532 = vunpack.c.h.b16 %v96
    %v533 = vunpack.c.l.b16 %v97
    %v534 = vunpack.c.h.b16 %v97
    %v535 = vunpack.c.l.b16 %v98
    %v536 = vunpack.c.h.b16 %v98
    %v537 = vunpack.c.l.b16 %v99
    %v538 = vunpack.c.h.b16 %v99
    %v539 = vunpack.c.l.b16 %v100
    %v540 = vunpack.c.h.b16 %v100
    %v541 = vunpack.c.l.b16 %v101
    %v542 = vunpack.c.h.b16 %v101
    %v543 = vunpack.c.l.b16 %v102
    %v544 = vunpack.c.h.b16 %v102
    %v545 = vunpack.c.l.b16 %v103
    %v546 = vunpack.c.h.b16 %v103
    %v547 = vunpack.c.l.b16 %v104
    %v548 = vunpack.c.h.b16 %v104
    %v549 = vunpack.c.l.b16 %v105
    %v550 = vunpack.c.h.b16 %v105
    %v551 = vunpack.c.l.b16 %v106
    %v552 = vunpack.c.h.b16 %v106
    %v553 = vunpack.c.l.b16 %v107
    %v554 = vunpack.c.h.b16 %v107
    %v555 = vunpack.c.l.b16 %v108
    %v556 = vunpack.c.h.b16 %v108
    %v557 = vunpack.c.l.b16 %v109
    %v558 = vunpack.c.h.b16 %v109
    %v559 = vunpack.c.l.b16 %v110
    %v560 = vunpack.c.h.b16 %v110
    %v561 = vunpack.c.l.b16 %v111
    %v562 = vunpack.c.h.b16 %v111
    %v563 = vunpack.c.l.b16 %v112
    %v564 = vunpack.c.h.b16 %v112
    %v565 = vunpack.c.l.b16 %v113
    %v566 = vunpack.c.h.b16 %v113
    %v567 = vunpack.c.l.b16 %v114
    %v568 = vunpack.c.h.b16 %v114
    %v569 = vunpack.c.l.b16 %v115
    %v570 = vunpack.c.h.b16 %v115
    %v571 = vunpack.c.l.b16 %v116
    %v572 = vunpack.c.h.b16 %v116
    %v573 = vunpack.c.l.b16 %v117
    %v574 = vunpack.c.h.b16 %v117
    %v575 = vunpack.c.l.b16 %v118
    %v576 = vunpack.c.h.b16 %v118
    %v577 = vunpack.c.l.b16 %v119
    %v578 = vunpack.c.h.b16 %v119
    %v579 = vunpack.c.l.b16 %v120
    %v580 = vunpack.c.h.b16 %v120
    %v581 = vunpack.c.l.b16 %v121
    %v582 = vunpack.c.h.b16 %v121
    %v583 = vunpack.c.l.b16 %v122
    %v584 = vunpack.c.h.b16 %v122
    %v585 = vunpack.c.l.b16 %v123
    %v586 = vunpack.c.h.b16 %v123
    %v587 = vunpack.c.l.b16 %v124
    %v588 = vunpack.c.h.b16 %v124
    %v589 = vunpack.c.l.b16 %v125
    %v590 = vunpack.c.h.b16 %v125
    %v591 = vunpack.c.l.b16 %v126
    %v592 = vunpack.c.h.b16 %v126
    %v593 = vunpack.c.l.b16 %v127
    %v594 = vunpack.c.h.b16 %v127
    %v595 = vunpack.c.l.b16 %v128
    %v596 = vunpack.c.h.b16 %v128
    %v597 = vunpack.c.l.b16 %v129
    %v598 = vunpack.c.h.b16 %v129
    %v599 = vunpack.c.l.b16 %v130
    %v600 = vunpack.c.h.b16 %v130
    %v601 = vunpack.c.l.b16 %v131
    %v602 = vunpack.c.h.b16 %v131
    %v603 = vunpack.c.l.b16 %v132
    %v604 = vunpack.c.h.b16 %v132
    %v605 = vunpack.c.l.b16 %v133
    %v606 = vunpack.c.h.b16 %v133
    %v607 = vunpack.c.l.b16 %v134
    %v608 = vunpack.c.h.b16 %v134
    %v609 = vunpack.c.l.b16 %v135
    %v610 = vunpack.c.h.b16 %v135
    %v611 = vunpack.c.l.b16 %v136
    %v612 = vunpack.c.h.b16 %v136
    %v613 = vunpack.c.l.b16 %v137
    %v614 = vunpack.c.h.b16 %v137
    %v615 = vunpack.c.l.b16 %v138
    %v616 = vunpack.c.h.b16 %v138
    %v617 = vunpack.c.l.b16 %v139
    %v618 = vunpack.c.h.b16 %v139
    %v619 = vunpack.c.l.b16 %v140
    %v620 = vunpack.c.h.b16 %v140
    %v621 = vunpack.c.l.b16 %v141
    %v622 = vunpack.c.h.b16 %v141
    %v623 = vunpack.c.l.b16 %v142
    %v624 = vunpack.c.h.b16 %v142
    %v625 = vunpack.c.l.b16 %v143
    %v626 = vunpack.c.h.b16 %v143
    %v627 = vunpack.c.l.b16 %v144
    %v628 = vunpack.c.h.b16 %v144
    %v629 = vunpack.c.l.b16 %v145
    %v630 = vunpack.c.h.b16 %v145
    %v631 = vunpack.c.l.b16 %v146
    %v632 = vunpack.c.h.b16 %v146
    %v633 = vunpack.c.l.b16 %v147
    %v634 = vunpack.c.h.b16 %v147
    %v635 = vunpack.c.l.b16 %v148
    %v636 = vunpack.c.h.b16 %v148
    %v637 = vunpack.c.l.b16 %v149
    %v638 = vunpack.c.h.b16 %v149
    %v639 = vunpack.c.l.b16 %v150
    %v640 = vunpack.c.h.b16 %v150
    %v641 = vunpack.c.l.b16 %v151
    %v642 = vunpack.c.h.b16 %v151
    %v643 = vunpack.c.l.b16 %v152
    %v644 = vunpack.c.h.b16 %v152
    %v645 = vunpack.c.l.b16 %v153
    %v646 = vunpack.c.h.b16 %v153
    %v647 = vunpack.c.l.b16 %v154
    %v648 = vunpack.c.h.b16 %v154
    %v649 = vunpack.c.l.b16 %v155
    %v650 = vunpack.c.h.b16 %v155
    %v651 = vunpack.c.l.b16 %v156
    %v652 = vunpack.c.h.b16 %v156
    %v653 = vunpack.c.l.b16 %v157
    %v654 = vunpack.c.h.b16 %v157
    %v655 = vunpack.c.l.b16 %v158
    %v656 = vunpack.c.h.b16 %v158
    %v657 = vunpack.c.l.b16 %v159
    %v658 = vunpack.c.h.b16 %v159
    %v659 = vunpack.c.l.b16 %v160
    %v660 = vunpack.c.h.b16 %v160
    %v661 = vunpack.c.l.b16 %v161
    %v662 = vunpack.c.h.b16 %v161
    %v663 = vunpack.c.l.b16 %v162
    %v664 = vunpack.c.h.b16 %v162
    %v665 = vunpack.c.l.b16 %v163
    %v666 = vunpack.c.h.b16 %v163
    %v667 = vunpack.c.l.b16 %v164
    %v668 = vunpack.c.h.b16 %v164
    %v669 = vunpack.c.l.b16 %v165
    %v670 = vunpack.c.h.b16 %v165
    %v671 = vunpack.c.l.b16 %v166
    %v672 = vunpack.c.h.b16 %v166
    %v673 = vunpack.c.l.b16 %v167
    %v674 = vunpack.c.h.b16 %v167
    %v675 = vunpack.c.l.b16 %v168
    %v676 = vunpack.c.h.b16 %v168
    %v677 = vunpack.c.l.b16 %v169
    %v678 = vunpack.c.h.b16 %v169
    %v679 = vunpack.c.l.b16 %v170
    %v680 = vunpack.c.h.b16 %v170
    %v681 = vunpack.c.l.b16 %v171
    %v682 = vunpack.c.h.b16 %v171
    %v683 = vunpack.c.l.b16 %v172
    %v684 = vunpack.c.h.b16 %v172
    %v685 = vunpack.c.l.b16 %v173
    %v686 = vunpack.c.h.b16 %v173
    %v687 = vunpack.c.l.b16 %v174
    %v688 = vunpack.c.h.b16 %v174
    %v689 = vunpack.c.l.b16 %v175
    %v690 = vunpack.c.h.b16 %v175
    %v691 = vunpack.c.l.b16 %v176
    %v692 = vunpack.c.h.b16 %v176
    %v693 = vunpack.c.l.b16 %v177
    %v694 = vunpack.c.h.b16 %v177
    %v695 = vunpack.c.l.b16 %v178
    %v696 = vunpack.c.h.b16 %v178
    %v697 = vunpack.c.l.b16 %v179
    %v698 = vunpack.c.h.b16 %v179
    %v699 = vunpack.c.l.b16 %v180
    %v700 = vunpack.c.h.b16 %v180
    %v701 = vunpack.c.l.b16 %v181
    %v702 = vunpack.c.h.b16 %v181
    %v703 = vunpack.c.l.b16 %v182
    %v704 = vunpack.c.h.b16 %v182
    %v705 = vunpack.c.l.b16 %v183
    %v706 = vunpack.c.h.b16 %v183
    %v707 = vunpack.c.l.b16 %v184
    %v708 = vunpack.c.h.b16 %v184
    %v709 = vunpack.c.l.b16 %v185
    %v710 = vunpack.c.h.b16 %v185
    %v711 = vunpack.c.l.b16 %v186
    %v712 = vunpack.c.h.b16 %v186
    %v713 = vunpack.c.l.b16 %v187
    %v714 = vunpack.c.h.b16 %v187
    %v715 = vunpack.c.l.b16 %v188
    %v716 = vunpack.c.h.b16 %v188
    %v717 = vunpack.c.l.b16 %v189
    %v718 = vunpack.c.h.b16 %v189
    %v719 = vunpack.c.l.b16 %v190
    %v720 = vunpack.c.h.b16 %v190
    %v721 = vunpack.c.l.b16 %v191
    %v722 = vunpack.c.h.b16 %v191
    %v723 = vunpack.c.l.b16 %v192
    %v724 = vunpack.c.h.b16 %v192
    %v725 = vunpack.c.l.b16 %v193
    %v726 = vunpack.c.h.b16 %v193
    %v727 = vunpack.c.l.b16 %v194
    %v728 = vunpack.c.h.b16 %v194
    %v729 = vunpack.c.l.b16 %v195
    %v730 = vunpack.c.h.b16 %v195
    %v731 = vunpack.c.l.b16 %v196
    %v732 = vunpack.c.h.b16 %v196
    %v733 = vunpack.c.l.b16 %v197
    %v734 = vunpack.c.h.b16 %v197
    %v735 = vunpack.c.l.b16 %v198
    %v736 = vunpack.c.h.b16 %v198
    %v737 = vunpack.c.l.b16 %v199
    %v738 = vunpack.c.h.b16 %v199
    %v739 = vunpack.c.l.b16 %v200
    %v740 = vunpack.c.h.b16 %v200
    %v741 = vunpack.c.l.b16 %v201
    %v742 = vunpack.c.h.b16 %v201
    %v743 = vunpack.c.l.b16 %v202
    %v744 = vunpack.c.h.b16 %v202
    %v745 = vunpack.c.l.b16 %v203
    %v746 = vunpack.c.h.b16 %v203
    %v747 = vunpack.c.l.b16 %v204
    %v748 = vunpack.c.h.b16 %v204
    %v749 = vunpack.c.l.b16 %v205
    %v750 = vunpack.c.h.b16 %v205
    %v751 = vunpack.c.l.b16 %v206
    %v752 = vunpack.c.h.b16 %v206
    %v753 = vunpack.c.l.b16 %v207
    %v754 = vunpack.c.h.b16 %v207
    %v755 = vunpack.c.l.b16 %v208
    %v756 = vunpack.c.h.b16 %v208
    %v757 = vunpack.c.l.b16 %v209
    %v758 = vunpack.c.h.b16 %v209
    %v759 = vunpack.c.l.b16 %v210
    %v760 = vunpack.c.h.b16 %v210
    %v761 = vunpack.c.l.b16 %v211
    %v762 = vunpack.c.h.b16 %v211
    %v763 = vunpack.c.l.b16 %v212
    %v764 = vunpack.c.h.b16 %v212
    %v765 = vunpack.c.l.b16 %v213
    %v766 = vunpack.c.h.b16 %v213
    %v767 = vunpack.c.l.b16 %v214
    %v768 = vunpack.c.h.b16 %v214
    %v769 = vunpack.c.l.b16 %v215
    %v770 = vunpack.c.h.b16 %v215
    %v771 = vunpack.c.l.b16 %v216
    %v772 = vunpack.c.h.b16 %v216
    %v773 = vunpack.c.l.b16 %v217
    %v774 = vunpack.c.h.b16 %v217
    %v775 = vunpack.c.l.b16 %v218
    %v776 = vunpack.c.h.b16 %v218
    %v777 = vunpack.c.l.b16 %v219
    %v778 = vunpack.c.h.b16 %v219
    %v779 = vunpack.c.l.b16 %v220
    %v780 = vunpack.c.h.b16 %v220
    %v781 = vunpack.c.l.b16 %v221
    %v782 = vunpack.c.h.b16 %v221
    %v783 = vunpack.c.l.b16 %v222
    %v784 = vunpack.c.h.b16 %v222
    %v785 = vunpack.c.l.b16 %v223
    %v786 = vunpack.c.h.b16 %v223
    %v787 = vunpack.c.l.b16 %v224
    %v788 = vunpack.c.h.b16 %v224
    %v789 = vunpack.c.l.b16 %v225
    %v790 = vunpack.c.h.b16 %v225
    %v791 = vunpack.c.l.b16 %v226
    %v792 = vunpack.c.h.b16 %v226
    %v793 = vunpack.c.l.b16 %v227
    %v794 = vunpack.c.h.b16 %v227
    %v795 = vunpack.c.l.b16 %v228
    %v796 = vunpack.c.h.b16 %v228
    %v797 = vunpack.c.l.b16 %v229
    %v798 = vunpack.c.h.b16 %v229
    %v799 = vunpack.c.l.b16 %v230
    %v800 = vunpack.c.h.b16 %v230
    %v801 = vunpack.c.l.b16 %v231
    %v802 = vunpack.c.h.b16 %v231
    %v803 = vunpack.c.l.b16 %v232
    %v804 = vunpack.c.h.b16 %v232
    %v805 = vunpack.c.l.b16 %v233
    %v806 = vunpack.c.h.b16 %v233
    %v807 = vunpack.c.l.b16 %v234
    %v808 = vunpack.c.h.b16 %v234
    %v809 = vunpack.c.l.b16 %v235
    %v810 = vunpack.c.h.b16 %v235
    %v811 = vunpack.c.l.b16 %v236
    %v812 = vunpack.c.h.b16 %v236
    %v813 = vunpack.c.l.b16 %v237
    %v814 = vunpack.c.h.b16 %v237
    %v815 = vunpack.c.l.b16 %v238
    %v816 = vunpack.c.h.b16 %v238
    %v817 = vunpack.c.l.b16 %v239
    %v818 = vunpack.c.h.b16 %v239
    %v819 = vunpack.c.l.b16 %v240
    %v820 = vunpack.c.h.b16 %v240
    %v821 = vunpack.c.l.b16 %v241
    %v822 = vunpack.c.h.b16 %v241
    %v823 = vunpack.c.l.b16 %v242
    %v824 = vunpack.c.h.b16 %v242
    %v825 = vunpack.c.l.b16 %v243
    %v826 = vunpack.c.h.b16 %v243
    %v827 = vunpack.c.l.b16 %v244
    %v828 = vunpack.c.h.b16 %v244
    %v829 = vunpack.c.l.b16 %v245
    %v830 = vunpack.c.h.b16 %v245
    %v831 = vunpack.c.l.b16 %v246
    %v832 = vunpack.c.h.b16 %v246
    %v833 = vunpack.c.l.b16 %v247
    %v834 = vunpack.c.h.b16 %v247
    %v835 = vunpack.c.l.b16 %v248
    %v836 = vunpack.c.h.b16 %v248
    %v837 = vunpack.c.l.b16 %v249
    %v838 = vunpack.c.h.b16 %v249
    %v839 = vunpack.c.l.b16 %v250
    %v840 = vunpack.c.h.b16 %v250
    %v841 = vunpack.c.l.b16 %v251
    %v842 = vunpack.c.h.b16 %v251
    %v843 = vunpack.c.l.b16 %v252
    %v844 = vunpack.c.h.b16 %v252
    %v845 = vunpack.c.l.b16 %v253
    %v846 = vunpack.c.h.b16 %v253
    %v847 = vunpack.c.l.b16 %v254
    %v848 = vunpack.c.h.b16 %v254
    %v849 = vunpack.c.l.b16 %v255
    %v850 = vunpack.c.h.b16 %v255
    %v851 = vunpack.c.l.b16 %v256
    %v852 = vunpack.c.h.b16 %v256
    %v853 = vunpack.c.l.b16 %v257
    %v854 = vunpack.c.h.b16 %v257
    %v855 = vunpack.c.l.b16 %v258
    %v856 = vunpack.c.h.b16 %v258
    %v857 = vunpack.c.l.b16 %v259
    %v858 = vunpack.c.h.b16 %v259
    %v859 = vunpack.c.l.b16 %v260
    %v860 = vunpack.c.h.b16 %v260
    %v861 = vunpack.c.l.b16 %v261
    %v862 = vunpack.c.h.b16 %v261
    %v863 = vunpack.c.l.b16 %v262
    %v864 = vunpack.c.h.b16 %v262
    %v865 = vunpack.c.l.b16 %v263
    %v866 = vunpack.c.h.b16 %v263
    %v867 = vunpack.c.l.b16 %v264
    %v868 = vunpack.c.h.b16 %v264
    %v869 = vunpack.c.l.b16 %v265
    %v870 = vunpack.c.h.b16 %v265
    %v871 = vunpack.c.l.b16 %v266
    %v872 = vunpack.c.h.b16 %v266
    %v873 = vpack.c.b16 %v493, %v489
    %v874 = vpack.c.b16 %v494, %v490
    %v875 = vpack.c.b16 %v495, %v491
    %v876 = vpack.c.b16 %v496, %v492
    %v877 = vpack.c.b16 %v501, %v497
    %v878 = vpack.c.b16 %v502, %v498
    %v879 = vpack.c.b16 %v503, %v499
    %v880 = vpack.c.b16 %v504, %v500
    %v881 = vpack.c.b16 %v509, %v505
    %v882 = vpack.c.b16 %v510, %v506
    %v883 = vpack.c.b16 %v511, %v507
    %v884 = vpack.c.b16 %v512, %v508
    %v885 = vpack.c.b16 %v517, %v513
    %v886 = vpack.c.b16 %v518, %v514
    %v887 = vpack.c.b16 %v519, %v515
    %v888 = vpack.c.b16 %v520, %v516
    %v889 = vpack.c.b16 %v525, %v521
    %v890 = vpack.c.b16 %v526, %v522
    %v891 = vpack.c.b16 %v527, %v523
    %v892 = vpack.c.b16 %v528, %v524
    %v893 = vpack.c.b16 %v533, %v529
    %v894 = vpack.c.b16 %v534, %v530
    %v895 = vpack.c.b16 %v535, %v531
    %v896 = vpack.c.b16 %v536, %v532
    %v897 = vpack.c.b16 %v541, %v537
    %v898 = vpack.c.b16 %v542, %v538
    %v899 = vpack.c.b16 %v543, %v539
    %v900 = vpack.c.b16 %v544, %v540
    %v901 = vpack.c.b16 %v549, %v545
    %v902 = vpack.c.b16 %v550, %v546
    %v903 = vpack.c.b16 %v551, %v547
    %v904 = vpack.c.b16 %v552, %v548
    %v905 = vpack.c.b16 %v557, %v553
    %v906 = vpack.c.b16 %v558, %v554
    %v907 = vpack.c.b16 %v559, %v555
    %v908 = vpack.c.b16 %v560, %v556
    %v909 = vpack.c.b16 %v565, %v561
    %v910 = vpack.c.b16 %v566, %v562
    %v911 = vpack.c.b16 %v567, %v563
    %v912 = vpack.c.b16 %v568, %v564
    %v913 = vpack.c.b16 %v573, %v569
    %v914 = vpack.c.b16 %v574, %v570
    %v915 = vpack.c.b16 %v575, %v571
    %v916 = vpack.c.b16 %v576, %v572
    %v917 = vpack.c.b16 %v581, %v577
    %v918 = vpack.c.b16 %v582, %v578
    %v919 = vpack.c.b16 %v583, %v579
    %v920 = vpack.c.b16 %v584, %v580
    %v921 = vpack.c.b16 %v589, %v585
    %v922 = vpack.c.b16 %v590, %v586
    %v923 = vpack.c.b16 %v591, %v587
    %v924 = vpack.c.b16 %v592, %v588
    %v925 = vpack.c.b16 %v597, %v593
    %v926 = vpack.c.b16 %v598, %v594
    %v927 = vpack.c.b16 %v599, %v595
    %v928 = vpack.c.b16 %v600, %v596
    %v929 = vpack.c.b16 %v605, %v601
    %v930 = vpack.c.b16 %v606, %v602
    %v931 = vpack.c.b16 %v607, %v603
    %v932 = vpack.c.b16 %v608, %v604
    %v933 = vpack.c.b16 %v613, %v609
    %v934 = vpack.c.b16 %v614, %v610
    %v935 = vpack.c.b16 %v615, %v611
    %v936 = vpack.c.b16 %v616, %v612
    %v937 = vpack.c.b16 %v621, %v617
    %v938 = vpack.c.b16 %v622, %v618
    %v939 = vpack.c.b16 %v623, %v619
    %v940 = vpack.c.b16 %v624, %v620
    %v941 = vpack.c.b16 %v629, %v625
    %v942 = vpack.c.b16 %v630, %v626
    %v943 = vpack.c.b16 %v631, %v627
    %v944 = vpack.c.b16 %v632, %v628
    %v945 = vpack.c.b16 %v637, %v633
    %v946 = vpack.c.b16 %v638, %v634
    %v947 = vpack.c.b16 %v639, %v635
    %v948 = vpack.c.b16 %v640, %v636
    %v949 = vpack.c.b16 %v645, %v641
    %v950 = vpack.c.b16 %v646, %v642
    %v951 = vpack.c.b16 %v647, %v643
    %v952 = vpack.c.b16 %v648, %v644
    %v953 = vpack.c.b16 %v653, %v649
    %v954 = vpack.c.b16 %v654, %v650
    %v955 = vpack.c.b16 %v655, %v651
    %v956 = vpack.c.b16 %v656, %v652
    %v957 = vpack.c.b16 %v661, %v657
    %v958 = vpack.c.b16 %v662, %v658
    %v959 = vpack.c.b16 %v663, %v659
    %v960 = vpack.c.b16 %v664, %v660
    %v961 = vpack.c.b16 %v669, %v665
    %v962 = vpack.c.b16 %v670, %v666
    %v963 = vpack.c.b16 %v671, %v667
    %v964 = vpack.c.b16 %v672, %v668
    %v965 = vpack.c.b16 %v677, %v673
    %v966 = vpack.c.b16 %v678, %v674
    %v967 = vpack.c.b16 %v679, %v675
    %v968 = vpack.c.b16 %v680, %v676
    %v969 = vpack.c.b16 %v685, %v681
    %v970 = vpack.c.b16 %v686, %v682
    %v971 = vpack.c.b16 %v687, %v683
    %v972 = vpack.c.b16 %v688, %v684
    %v973 = vpack.c.b16 %v693, %v689
    %v974 = vpack.c.b16 %v694, %v690
    %v975 = vpack.c.b16 %v695, %v691
    %v976 = vpack.c.b16 %v696, %v692
    %v977 = vpack.c.b16 %v701, %v697
    %v978 = vpack.c.b16 %v702, %v698
    %v979 = vpack.c.b16 %v703, %v699
    %v980 = vpack.c.b16 %v704, %v700
    %v981 = vpack.c.b16 %v709, %v705
    %v982 = vpack.c.b16 %v710, %v706
    %v983 = vpack.c.b16 %v711, %v707
    %v984 = vpack.c.b16 %v712, %v708
    %v985 = vpack.c.b16 %v717, %v713
    %v986 = vpack.c.b16 %v718, %v714
    %v987 = vpack.c.b16 %v719, %v715
    %v988 = vpack.c.b16 %v720, %v716
    %v989 = vpack.c.b16 %v725, %v721
    %v990 = vpack.c.b16 %v726, %v722
    %v991 = vpack.c.b16 %v727, %v723
    %v992 = vpack.c.b16 %v728, %v724
    %v993 = vpack.c.b16 %v733, %v729
    %v994 = vpack.c.b16 %v734, %v730
    %v995 = vpack.c.b16 %v735, %v731
    %v996 = vpack.c.b16 %v736, %v732
    %v997 = vpack.c.b16 %v741, %v737
    %v998 = vpack.c.b16 %v742, %v738
    %v999 = vpack.c.b16 %v743, %v739
    %v1000 = vpack.c.b16 %v744, %v740
    %v1001 = vpack.c.b16 %v749, %v745
    %v1002 = vpack.c.b16 %v750, %v746
    %v1003 = vpack.c.b16 %v751, %v747
    %v1004 = vpack.c.b16 %v752, %v748
    %v1005 = vpack.c.b16 %v757, %v753
    %v1006 = vpack.c.b16 %v758, %v754
    %v1007 = vpack.c.b16 %v759, %v755
    %v1008 = vpack.c.b16 %v760, %v756
    %v1009 = vpack.c.b16 %v765, %v761
    %v1010 = vpack.c.b16 %v766, %v762
    %v1011 = vpack.c.b16 %v767, %v763
    %v1012 = vpack.c.b16 %v768, %v764
    %v1013 = vpack.c.b16 %v773, %v769
    %v1014 = vpack.c.b16 %v774, %v770
    %v1015 = vpack.c.b16 %v775, %v771
    %v1016 = vpack.c.b16 %v776, %v772
    %v1017 = vpack.c.b16 %v781, %v777
    %v1018 = vpack.c.b16 %v782, %v778
    %v1019 = vpack.c.b16 %v783, %v779
    %v1020 = vpack.c.b16 %v784, %v780
    %v1021 = vpack.c.b16 %v789, %v785
    %v1022 = vpack.c.b16 %v790, %v786
    %v1023 = vpack.c.b16 %v791, %v787
    %v1024 = vpack.c.b16 %v792, %v788
    %v1025 = vpack.c.b16 %v797, %v793
    %v1026 = vpack.c.b16 %v798, %v794
    %v1027 = vpack.c.b16 %v799, %v795
    %v1028 = vpack.c.b16 %v800, %v796
    %v1029 = vpack.c.b16 %v805, %v801
    %v1030 = vpack.c.b16 %v806, %v802
    %v1031 = vpack.c.b16 %v807, %v803
    %v1032 = vpack.c.b16 %v808, %v804
    %v1033 = vpack.c.b16 %v813, %v809
    %v1034 = vpack.c.b16 %v814, %v810
    %v1035 = vpack.c.b16 %v815, %v811
    %v1036 = vpack.c.b16 %v816, %v812
    %v1037 = vpack.c.b16 %v821, %v817
    %v1038 = vpack.c.b16 %v822, %v818
    %v1039 = vpack.c.b16 %v823, %v819
    %v1040 = vpack.c.b16 %v824, %v820
    %v1041 = vpack.c.b16 %v829, %v825
    %v1042 = vpack.c.b16 %v830, %v826
    %v1043 = vpack.c.b16 %v831, %v827
    %v1044 = vpack.c.b16 %v832, %v828
    %v1045 = vpack.c.b16 %v837, %v833
    %v1046 = vpack.c.b16 %v838, %v834
    %v1047 = vpack.c.b16 %v839, %v835
    %v1048 = vpack.c.b16 %v840, %v836
    %v1049 = vpack.c.b16 %v845, %v841
    %v1050 = vpack.c.b16 %v846, %v842
    %v1051 = vpack.c.b16 %v847, %v843
    %v1052 = vpack.c.b16 %v848, %v844
    %v1053 = vpack.c.b16 %v853, %v849
    %v1054 = vpack.c.b16 %v854, %v850
    %v1055 = vpack.c.b16 %v855, %v851
    %v1056 = vpack.c.b16 %v856, %v852
    %v1057 = vpack.c.b16 %v861, %v857
    %v1058 = vpack.c.b16 %v862, %v858
    %v1059 = vpack.c.b16 %v863, %v859
    %v1060 = vpack.c.b16 %v864, %v860
    %v1061 = vpack.c.b16 %v869, %v865
    %v1062 = vpack.c.b16 %v870, %v866
    %v1063 = vpack.c.b16 %v871, %v867
    %v1064 = vpack.c.b16 %v872, %v868
    %1257 = vmatpush.bf16.msra.mxu0 %v901
    %1258 = vmatpush.bf16.msra.mxu0 %v897
    %1259 = vmatpush.bf16.msra.mxu0 %v893
    %1260 = vmatpush.bf16.msra.mxu0 %v889
    %1261 = vmatpush.bf16.msra.mxu0 %v885
    %1262 = vmatpush.bf16.msra.mxu0 %v881
    %1263 = vmatpush.bf16.msra.mxu0 %v877
    %1264 = vmatpush.bf16.msra.mxu0 %v873
    %1265 = vmatmul.bf16.gmra.mxu0 %v285
    %v1266 = vpop.f32.mrf.mxu0
    %v1267 = vadd.f32 0.0, %v1266
    %v1268 = vpop.f32.mrf.mxu0
    %v1269 = vadd.f32 0.0, %v1268
    %1270 = vdwg.mxu0
    %1271 = vmatpush.bf16.msra.mxu0 %v933
    %1272 = vmatpush.bf16.msra.mxu0 %v929
    %1273 = vmatpush.bf16.msra.mxu0 %v925
    %1274 = vmatpush.bf16.msra.mxu0 %v921
    %1275 = vmatpush.bf16.msra.mxu0 %v917
    %1276 = vmatpush.bf16.msra.mxu0 %v913
    %1277 = vmatpush.bf16.msra.mxu0 %v909
    %1278 = vmatpush.bf16.msra.mxu0 %v905
    %1279 = vmatmul.bf16.gmra.mxu0 %v286
    %v1280 = vpop.f32.mrf.mxu0
    %v1281 = vadd.f32 %v1267, %v1280
    %v1282 = vpop.f32.mrf.mxu0
    %v1283 = vadd.f32 %v1269, %v1282
    %1284 = vdwg.mxu0
    %1285 = vmatpush.bf16.msra.mxu0 %v965
    %1286 = vmatpush.bf16.msra.mxu0 %v961
    %1287 = vmatpush.bf16.msra.mxu0 %v957
    %1288 = vmatpush.bf16.msra.mxu0 %v953
    %1289 = vmatpush.bf16.msra.mxu0 %v949
    %1290 = vmatpush.bf16.msra.mxu0 %v945
    %1291 = vmatpush.bf16.msra.mxu0 %v941
    %1292 = vmatpush.bf16.msra.mxu0 %v937
    %1293 = vmatmul.bf16.gmra.mxu0 %v287
    %v1294 = vpop.f32.mrf.mxu0
    %v1295 = vadd.f32 %v1281, %v1294
    %v1296 = vpop.f32.mrf.mxu0
    %v1297 = vadd.f32 %v1283, %v1296
    %1298 = vdwg.mxu0
    %1299 = vmatpush.bf16.msra.mxu0 %v997
    %1300 = vmatpush.bf16.msra.mxu0 %v993
    %1301 = vmatpush.bf16.msra.mxu0 %v989
    %1302 = vmatpush.bf16.msra.mxu0 %v985
    %1303 = vmatpush.bf16.msra.mxu0 %v981
    %1304 = vmatpush.bf16.msra.mxu0 %v977
    %1305 = vmatpush.bf16.msra.mxu0 %v973
    %1306 = vmatpush.bf16.msra.mxu0 %v969
    %1307 = vmatmul.bf16.gmra.mxu0 %v288
    %v1308 = vpop.f32.mrf.mxu0
    %v1309 = vadd.f32 %v1295, %v1308
    %v1310 = vpop.f32.mrf.mxu0
    %v1311 = vadd.f32 %v1297, %v1310
    %1312 = vdwg.mxu0
    %1313 = vmatpush.bf16.msra.mxu0 %v1029
    %1314 = vmatpush.bf16.msra.mxu0 %v1025
    %1315 = vmatpush.bf16.msra.mxu0 %v1021
    %1316 = vmatpush.bf16.msra.mxu0 %v1017
    %1317 = vmatpush.bf16.msra.mxu0 %v1013
    %1318 = vmatpush.bf16.msra.mxu0 %v1009
    %1319 = vmatpush.bf16.msra.mxu0 %v1005
    %1320 = vmatpush.bf16.msra.mxu0 %v1001
    %1321 = vmatmul.bf16.gmra.mxu0 %v289
    %v1322 = vpop.f32.mrf.mxu0
    %v1323 = vadd.f32 %v1309, %v1322
    %v1324 = vpop.f32.mrf.mxu0
    %v1325 = vadd.f32 %v1311, %v1324
    %1326 = vdwg.mxu0
    %1327 = vmatpush.bf16.msra.mxu0 %v1061
    %1328 = vmatpush.bf16.msra.mxu0 %v1057
    %1329 = vmatpush.bf16.msra.mxu0 %v1053
    %1330 = vmatpush.bf16.msra.mxu0 %v1049
    %1331 = vmatpush.bf16.msra.mxu0 %v1045
    %1332 = vmatpush.bf16.msra.mxu0 %v1041
    %1333 = vmatpush.bf16.msra.mxu0 %v1037
    %1334 = vmatpush.bf16.msra.mxu0 %v1033
    %1335 = vmatmul.bf16.gmra.mxu0 %v290
    %v1336 = vpop.f32.mrf.mxu0
    %v1337 = vadd.f32 %v1323, %v1336
    %v1338 = vpop.f32.mrf.mxu0
    %v1339 = vadd.f32 %v1325, %v1338
    %1340 = vdwg.mxu0
    %1341 = vmatpush.bf16.msra.mxu0 %v902
    %1342 = vmatpush.bf16.msra.mxu0 %v898
    %1343 = vmatpush.bf16.msra.mxu0 %v894
    %1344 = vmatpush.bf16.msra.mxu0 %v890
    %1345 = vmatpush.bf16.msra.mxu0 %v886
    %1346 = vmatpush.bf16.msra.mxu0 %v882
    %1347 = vmatpush.bf16.msra.mxu0 %v878
    %1348 = vmatpush.bf16.msra.mxu0 %v874
    %1349 = vmatmul.bf16.gmra.mxu0 %v285
    %v1350 = vpop.f32.mrf.mxu0
    %v1351 = vadd.f32 0.0, %v1350
    %v1352 = vpop.f32.mrf.mxu0
    %v1353 = vadd.f32 0.0, %v1352
    %1354 = vdwg.mxu0
    %1355 = vmatpush.bf16.msra.mxu0 %v934
    %1356 = vmatpush.bf16.msra.mxu0 %v930
    %1357 = vmatpush.bf16.msra.mxu0 %v926
    %1358 = vmatpush.bf16.msra.mxu0 %v922
    %1359 = vmatpush.bf16.msra.mxu0 %v918
    %1360 = vmatpush.bf16.msra.mxu0 %v914
    %1361 = vmatpush.bf16.msra.mxu0 %v910
    %1362 = vmatpush.bf16.msra.mxu0 %v906
    %1363 = vmatmul.bf16.gmra.mxu0 %v286
    %v1364 = vpop.f32.mrf.mxu0
    %v1365 = vadd.f32 %v1351, %v1364
    %v1366 = vpop.f32.mrf.mxu0
    %v1367 = vadd.f32 %v1353, %v1366
    %1368 = vdwg.mxu0
    %1369 = vmatpush.bf16.msra.mxu0 %v966
    %1370 = vmatpush.bf16.msra.mxu0 %v962
    %1371 = vmatpush.bf16.msra.mxu0 %v958
    %1372 = vmatpush.bf16.msra.mxu0 %v954
    %1373 = vmatpush.bf16.msra.mxu0 %v950
    %1374 = vmatpush.bf16.msra.mxu0 %v946
    %1375 = vmatpush.bf16.msra.mxu0 %v942
    %1376 = vmatpush.bf16.msra.mxu0 %v938
    %1377 = vmatmul.bf16.gmra.mxu0 %v287
    %v1378 = vpop.f32.mrf.mxu0
    %v1379 = vadd.f32 %v1365, %v1378
    %v1380 = vpop.f32.mrf.mxu0
    %v1381 = vadd.f32 %v1367, %v1380
    %1382 = vdwg.mxu0
    %1383 = vmatpush.bf16.msra.mxu0 %v998
    %1384 = vmatpush.bf16.msra.mxu0 %v994
    %1385 = vmatpush.bf16.msra.mxu0 %v990
    %1386 = vmatpush.bf16.msra.mxu0 %v986
    %1387 = vmatpush.bf16.msra.mxu0 %v982
    %1388 = vmatpush.bf16.msra.mxu0 %v978
    %1389 = vmatpush.bf16.msra.mxu0 %v974
    %1390 = vmatpush.bf16.msra.mxu0 %v970
    %1391 = vmatmul.bf16.gmra.mxu0 %v288
    %v1392 = vpop.f32.mrf.mxu0
    %v1393 = vadd.f32 %v1379, %v1392
    %v1394 = vpop.f32.mrf.mxu0
    %v1395 = vadd.f32 %v1381, %v1394
    %1396 = vdwg.mxu0
    %1397 = vmatpush.bf16.msra.mxu0 %v1030
    %1398 = vmatpush.bf16.msra.mxu0 %v1026
    %1399 = vmatpush.bf16.msra.mxu0 %v1022
    %1400 = vmatpush.bf16.msra.mxu0 %v1018
    %1401 = vmatpush.bf16.msra.mxu0 %v1014
    %1402 = vmatpush.bf16.msra.mxu0 %v1010
    %1403 = vmatpush.bf16.msra.mxu0 %v1006
    %1404 = vmatpush.bf16.msra.mxu0 %v1002
    %1405 = vmatmul.bf16.gmra.mxu0 %v289
    %v1406 = vpop.f32.mrf.mxu0
    %v1407 = vadd.f32 %v1393, %v1406
    %v1408 = vpop.f32.mrf.mxu0
    %v1409 = vadd.f32 %v1395, %v1408
    %1410 = vdwg.mxu0
    %1411 = vmatpush.bf16.msra.mxu0 %v1062
    %1412 = vmatpush.bf16.msra.mxu0 %v1058
    %1413 = vmatpush.bf16.msra.mxu0 %v1054
    %1414 = vmatpush.bf16.msra.mxu0 %v1050
    %1415 = vmatpush.bf16.msra.mxu0 %v1046
    %1416 = vmatpush.bf16.msra.mxu0 %v1042
    %1417 = vmatpush.bf16.msra.mxu0 %v1038
    %1418 = vmatpush.bf16.msra.mxu0 %v1034
    %1419 = vmatmul.bf16.gmra.mxu0 %v290
    %v1420 = vpop.f32.mrf.mxu0
    %v1421 = vadd.f32 %v1407, %v1420
    %v1422 = vpop.f32.mrf.mxu0
    %v1423 = vadd.f32 %v1409, %v1422
    %1424 = vdwg.mxu0
    %1425 = vmatpush.bf16.msra.mxu0 %v903
    %1426 = vmatpush.bf16.msra.mxu0 %v899
    %1427 = vmatpush.bf16.msra.mxu0 %v895
    %1428 = vmatpush.bf16.msra.mxu0 %v891
    %1429 = vmatpush.bf16.msra.mxu0 %v887
    %1430 = vmatpush.bf16.msra.mxu0 %v883
    %1431 = vmatpush.bf16.msra.mxu0 %v879
    %1432 = vmatpush.bf16.msra.mxu0 %v875
    %1433 = vmatmul.bf16.gmra.mxu0 %v285
    %v1434 = vpop.f32.mrf.mxu0
    %v1435 = vadd.f32 0.0, %v1434
    %v1436 = vpop.f32.mrf.mxu0
    %v1437 = vadd.f32 0.0, %v1436
    %1438 = vdwg.mxu0
    %1439 = vmatpush.bf16.msra.mxu0 %v935
    %1440 = vmatpush.bf16.msra.mxu0 %v931
    %1441 = vmatpush.bf16.msra.mxu0 %v927
    %1442 = vmatpush.bf16.msra.mxu0 %v923
    %1443 = vmatpush.bf16.msra.mxu0 %v919
    %1444 = vmatpush.bf16.msra.mxu0 %v915
    %1445 = vmatpush.bf16.msra.mxu0 %v911
    %1446 = vmatpush.bf16.msra.mxu0 %v907
    %1447 = vmatmul.bf16.gmra.mxu0 %v286
    %v1448 = vpop.f32.mrf.mxu0
    %v1449 = vadd.f32 %v1435, %v1448
    %v1450 = vpop.f32.mrf.mxu0
    %v1451 = vadd.f32 %v1437, %v1450
    %1452 = vdwg.mxu0
    %1453 = vmatpush.bf16.msra.mxu0 %v967
    %1454 = vmatpush.bf16.msra.mxu0 %v963
    %1455 = vmatpush.bf16.msra.mxu0 %v959
    %1456 = vmatpush.bf16.msra.mxu0 %v955
    %1457 = vmatpush.bf16.msra.mxu0 %v951
    %1458 = vmatpush.bf16.msra.mxu0 %v947
    %1459 = vmatpush.bf16.msra.mxu0 %v943
    %1460 = vmatpush.bf16.msra.mxu0 %v939
    %1461 = vmatmul.bf16.gmra.mxu0 %v287
    %v1462 = vpop.f32.mrf.mxu0
    %v1463 = vadd.f32 %v1449, %v1462
    %v1464 = vpop.f32.mrf.mxu0
    %v1465 = vadd.f32 %v1451, %v1464
    %1466 = vdwg.mxu0
    %1467 = vmatpush.bf16.msra.mxu0 %v999
    %1468 = vmatpush.bf16.msra.mxu0 %v995
    %1469 = vmatpush.bf16.msra.mxu0 %v991
    %1470 = vmatpush.bf16.msra.mxu0 %v987
    %1471 = vmatpush.bf16.msra.mxu0 %v983
    %1472 = vmatpush.bf16.msra.mxu0 %v979
    %1473 = vmatpush.bf16.msra.mxu0 %v975
    %1474 = vmatpush.bf16.msra.mxu0 %v971
    %1475 = vmatmul.bf16.gmra.mxu0 %v288
    %v1476 = vpop.f32.mrf.mxu0
    %v1477 = vadd.f32 %v1463, %v1476
    %v1478 = vpop.f32.mrf.mxu0
    %v1479 = vadd.f32 %v1465, %v1478
    %1480 = vdwg.mxu0
    %1481 = vmatpush.bf16.msra.mxu0 %v1031
    %1482 = vmatpush.bf16.msra.mxu0 %v1027
    %1483 = vmatpush.bf16.msra.mxu0 %v1023
    %1484 = vmatpush.bf16.msra.mxu0 %v1019
    %1485 = vmatpush.bf16.msra.mxu0 %v1015
    %1486 = vmatpush.bf16.msra.mxu0 %v1011
    %1487 = vmatpush.bf16.msra.mxu0 %v1007
    %1488 = vmatpush.bf16.msra.mxu0 %v1003
    %1489 = vmatmul.bf16.gmra.mxu0 %v289
    %v1490 = vpop.f32.mrf.mxu0
    %v1491 = vadd.f32 %v1477, %v1490
    %v1492 = vpop.f32.mrf.mxu0
    %v1493 = vadd.f32 %v1479, %v1492
    %1494 = vdwg.mxu0
    %1495 = vmatpush.bf16.msra.mxu0 %v1063
    %1496 = vmatpush.bf16.msra.mxu0 %v1059
    %1497 = vmatpush.bf16.msra.mxu0 %v1055
    %1498 = vmatpush.bf16.msra.mxu0 %v1051
    %1499 = vmatpush.bf16.msra.mxu0 %v1047
    %1500 = vmatpush.bf16.msra.mxu0 %v1043
    %1501 = vmatpush.bf16.msra.mxu0 %v1039
    %1502 = vmatpush.bf16.msra.mxu0 %v1035
    %1503 = vmatmul.bf16.gmra.mxu0 %v290
    %v1504 = vpop.f32.mrf.mxu0
    %v1505 = vadd.f32 %v1491, %v1504
    %v1506 = vpop.f32.mrf.mxu0
    %v1507 = vadd.f32 %v1493, %v1506
    %1508 = vdwg.mxu0
    %1509 = vmatpush.bf16.msra.mxu0 %v904
    %1510 = vmatpush.bf16.msra.mxu0 %v900
    %1511 = vmatpush.bf16.msra.mxu0 %v896
    %1512 = vmatpush.bf16.msra.mxu0 %v892
    %1513 = vmatpush.bf16.msra.mxu0 %v888
    %1514 = vmatpush.bf16.msra.mxu0 %v884
    %1515 = vmatpush.bf16.msra.mxu0 %v880
    %1516 = vmatpush.bf16.msra.mxu0 %v876
    %1517 = vmatmul.bf16.gmra.mxu0 %v285
    %v1518 = vpop.f32.mrf.mxu0
    %v1519 = vadd.f32 0.0, %v1518
    %v1520 = vpop.f32.mrf.mxu0
    %v1521 = vadd.f32 0.0, %v1520
    %1522 = vdwg.mxu0
    %1523 = vmatpush.bf16.msra.mxu0 %v936
    %1524 = vmatpush.bf16.msra.mxu0 %v932
    %1525 = vmatpush.bf16.msra.mxu0 %v928
    %1526 = vmatpush.bf16.msra.mxu0 %v924
    %1527 = vmatpush.bf16.msra.mxu0 %v920
    %1528 = vmatpush.bf16.msra.mxu0 %v916
    %1529 = vmatpush.bf16.msra.mxu0 %v912
    %1530 = vmatpush.bf16.msra.mxu0 %v908
    %1531 = vmatmul.bf16.gmra.mxu0 %v286
    %v1532 = vpop.f32.mrf.mxu0
    %v1533 = vadd.f32 %v1519, %v1532
    %v1534 = vpop.f32.mrf.mxu0
    %v1535 = vadd.f32 %v1521, %v1534
    %1536 = vdwg.mxu0
    %1537 = vmatpush.bf16.msra.mxu0 %v968
    %1538 = vmatpush.bf16.msra.mxu0 %v964
    %1539 = vmatpush.bf16.msra.mxu0 %v960
    %1540 = vmatpush.bf16.msra.mxu0 %v956
    %1541 = vmatpush.bf16.msra.mxu0 %v952
    %1542 = vmatpush.bf16.msra.mxu0 %v948
    %1543 = vmatpush.bf16.msra.mxu0 %v944
    %1544 = vmatpush.bf16.msra.mxu0 %v940
    %1545 = vmatmul.bf16.gmra.mxu0 %v287
    %v1546 = vpop.f32.mrf.mxu0
    %v1547 = vadd.f32 %v1533, %v1546
    %v1548 = vpop.f32.mrf.mxu0
    %v1549 = vadd.f32 %v1535, %v1548
    %1550 = vdwg.mxu0
    %1551 = vmatpush.bf16.msra.mxu0 %v1000
    %1552 = vmatpush.bf16.msra.mxu0 %v996
    %1553 = vmatpush.bf16.msra.mxu0 %v992
    %1554 = vmatpush.bf16.msra.mxu0 %v988
    %1555 = vmatpush.bf16.msra.mxu0 %v984
    %1556 = vmatpush.bf16.msra.mxu0 %v980
    %1557 = vmatpush.bf16.msra.mxu0 %v976
    %1558 = vmatpush.bf16.msra.mxu0 %v972
    %1559 = vmatmul.bf16.gmra.mxu0 %v288
    %v1560 = vpop.f32.mrf.mxu0
    %v1561 = vadd.f32 %v1547, %v1560
    %v1562 = vpop.f32.mrf.mxu0
    %v1563 = vadd.f32 %v1549, %v1562
    %1564 = vdwg.mxu0
    %1565 = vmatpush.bf16.msra.mxu0 %v1032
    %1566 = vmatpush.bf16.msra.mxu0 %v1028
    %1567 = vmatpush.bf16.msra.mxu0 %v1024
    %1568 = vmatpush.bf16.msra.mxu0 %v1020
    %1569 = vmatpush.bf16.msra.mxu0 %v1016
    %1570 = vmatpush.bf16.msra.mxu0 %v1012
    %1571 = vmatpush.bf16.msra.mxu0 %v1008
    %1572 = vmatpush.bf16.msra.mxu0 %v1004
    %1573 = vmatmul.bf16.gmra.mxu0 %v289
    %v1574 = vpop.f32.mrf.mxu0
    %v1575 = vadd.f32 %v1561, %v1574
    %v1576 = vpop.f32.mrf.mxu0
    %v1577 = vadd.f32 %v1563, %v1576
    %1578 = vdwg.mxu0
    %1579 = vmatpush.bf16.msra.mxu0 %v1064
    %1580 = vmatpush.bf16.msra.mxu0 %v1060
    %1581 = vmatpush.bf16.msra.mxu0 %v1056
    %1582 = vmatpush.bf16.msra.mxu0 %v1052
    %1583 = vmatpush.bf16.msra.mxu0 %v1048
    %1584 = vmatpush.bf16.msra.mxu0 %v1044
    %1585 = vmatpush.bf16.msra.mxu0 %v1040
    %1586 = vmatpush.bf16.msra.mxu0 %v1036
    %1587 = vmatmul.bf16.gmra.mxu0 %v290
    %v1588 = vpop.f32.mrf.mxu0
    %v1589 = vadd.f32 %v1575, %v1588
    %v1590 = vpop.f32.mrf.mxu0
    %v1591 = vadd.f32 %v1577, %v1590
    %1592 = vdwg.mxu0
    %v1593 = vadd.f32 %v61, %v1337
    %v1594 = vadd.f32 %v62, %v1421
    %v1595 = vadd.f32 %v63, %v1505
    %v1596 = vadd.f32 %v64, %v1589
    %v1597 = vadd.f32 %v65, %v1339
    %v1598 = vadd.f32 %v66, %v1423
    %v1599 = vadd.f32 %v67, %v1507
    %v1600 = vadd.f32 %v68, %v1591
    %1601 = vst [vmem:[#allocation2] sm:$0xff] %v1593
    %1602 = vst [vmem:[#allocation2 + $0x8] sm:$0xff] %v1594
    %1603 = vst [vmem:[#allocation2 + $0x10] sm:$0xff] %v1595
    %1604 = vst [vmem:[#allocation2 + $0x18] sm:$0xff] %v1596
    %1605 = vst [vmem:[#allocation2 + $0x20] sm:$0xff] %v1597
    %1606 = vst [vmem:[#allocation2 + $0x28] sm:$0xff] %v1598
    %1607 = vst [vmem:[#allocation2 + $0x30] sm:$0xff] %v1599
    %1608 = vst [vmem:[#allocation2 + $0x38] sm:$0xff] %v1600
    // Predicated region
    $region30: #{clip_classifier_forward.1} parent=1 // pred_check
      %p1609 = pneg %p49
    $region31: #{clip_classifier_forward.1} parent=1 // pred_check_branch
      %1611 = sbr.rel (%p1609) target = $region33
    $region32: #{clip_classifier_forward.1} parent=1 // pred_region
      %v1612 = vld [vmem:[#allocation2] sm:$0xff]
      %v1613 = vld [vmem:[#allocation2 + $0x8] sm:$0xff]
      %v1614 = vld [vmem:[#allocation2 + $0x10] sm:$0xff]
      %v1615 = vld [vmem:[#allocation2 + $0x18] sm:$0xff]
      %v1616 = vld [vmem:[#allocation2 + $0x20] sm:$0xff]
      %v1617 = vld [vmem:[#allocation2 + $0x28] sm:$0xff]
      %v1618 = vld [vmem:[#allocation2 + $0x30] sm:$0xff]
      %v1619 = vld [vmem:[#allocation2 + $0x38] sm:$0xff]
      %v1620 = vpack.c.bf16 %v1616, %v1612
      %v1621 = vpack.c.bf16 %v1617, %v1613
      %v1622 = vpack.c.bf16 %v1618, %v1614
      %v1623 = vpack.c.bf16 %v1619, %v1615
      %v1624 = vld [vmem:[#allocation5] sm:$0xf]
      %v1625 = vld [vmem:[#allocation5 + $0x4] sm:$0xf]
      %v1626 = vld [vmem:[#allocation5 + $0x8] sm:$0xf]
      %v1627 = vld [vmem:[#allocation5 + $0xc] sm:$0xf]
      %v1628 = vld [vmem:[#allocation5 + $0x10] sm:$0xf]
      %v1629 = vld [vmem:[#allocation5 + $0x14] sm:$0xf]
      %v1630 = vld [vmem:[#allocation5 + $0x18] sm:$0xf]
      %v1631 = vld [vmem:[#allocation5 + $0x1c] sm:$0xf]
      %v1632 = vld [vmem:[#allocation5 + $0x20] sm:$0xf]
      %v1633 = vld [vmem:[#allocation5 + $0x24] sm:$0xf]
      %v1634 = vld [vmem:[#allocation5 + $0x28] sm:$0xf]
      %v1635 = vld [vmem:[#allocation5 + $0x2c] sm:$0xf]
      %v1636 = vld [vmem:[#allocation5 + $0x30] sm:$0xf]
      %v1637 = vld [vmem:[#allocation5 + $0x34] sm:$0xf]
      %v1638 = vld [vmem:[#allocation5 + $0x38] sm:$0xf]
      %v1639 = vld [vmem:[#allocation5 + $0x3c] sm:$0xf]
      %v1640 = vld [vmem:[#allocation5 + $0x40] sm:$0xf]
      %v1641 = vld [vmem:[#allocation5 + $0x44] sm:$0xf]
      %v1642 = vld [vmem:[#allocation5 + $0x48] sm:$0xf]
      %v1643 = vld [vmem:[#allocation5 + $0x4c] sm:$0xf]
      %v1644 = vld [vmem:[#allocation5 + $0x50] sm:$0xf]
      %v1645 = vld [vmem:[#allocation5 + $0x54] sm:$0xf]
      %v1646 = vld [vmem:[#allocation5 + $0x58] sm:$0xf]
      %v1647 = vld [vmem:[#allocation5 + $0x5c] sm:$0xf]
      %v1648 = vld [vmem:[#allocation5 + $0x60] sm:$0xf]
      %v1649 = vld [vmem:[#allocation5 + $0x64] sm:$0xf]
      %v1650 = vld [vmem:[#allocation5 + $0x68] sm:$0xf]
      %v1651 = vld [vmem:[#allocation5 + $0x6c] sm:$0xf]
      %v1652 = vld [vmem:[#allocation5 + $0x70] sm:$0xf]
      %v1653 = vld [vmem:[#allocation5 + $0x74] sm:$0xf]
      %v1654 = vld [vmem:[#allocation5 + $0x78] sm:$0xf]
      %v1655 = vld [vmem:[#allocation5 + $0x7c] sm:$0xf]
      %v1656 = vld [vmem:[#allocation5 + $0x80] sm:$0xf]
      %v1657 = vld [vmem:[#allocation5 + $0x84] sm:$0xf]
      %v1658 = vld [vmem:[#allocation5 + $0x88] sm:$0xf]
      %v1659 = vld [vmem:[#allocation5 + $0x8c] sm:$0xf]
      %v1660 = vld [vmem:[#allocation5 + $0x90] sm:$0xf]
      %v1661 = vld [vmem:[#allocation5 + $0x94] sm:$0xf]
      %v1662 = vld [vmem:[#allocation5 + $0x98] sm:$0xf]
      %v1663 = vld [vmem:[#allocation5 + $0x9c] sm:$0xf]
      %v1664 = vld [vmem:[#allocation5 + $0xa0] sm:$0xf]
      %v1665 = vld [vmem:[#allocation5 + $0xa4] sm:$0xf]
      %v1666 = vld [vmem:[#allocation5 + $0xa8] sm:$0xf]
      %v1667 = vld [vmem:[#allocation5 + $0xac] sm:$0xf]
      %v1668 = vld [vmem:[#allocation5 + $0xb0] sm:$0xf]
      %v1669 = vld [vmem:[#allocation5 + $0xb4] sm:$0xf]
      %v1670 = vld [vmem:[#allocation5 + $0xb8] sm:$0xf]
      %v1671 = vld [vmem:[#allocation5 + $0xbc] sm:$0xf]
      %v1672 = vld [vmem:[#allocation5 + $0xc0] sm:$0xf]
      %v1673 = vld [vmem:[#allocation5 + $0xc4] sm:$0xf]
      %v1674 = vld [vmem:[#allocation5 + $0xc8] sm:$0xf]
      %v1675 = vld [vmem:[#allocation5 + $0xcc] sm:$0xf]
      %v1676 = vld [vmem:[#allocation5 + $0xd0] sm:$0xf]
      %v1677 = vld [vmem:[#allocation5 + $0xd4] sm:$0xf]
      %v1678 = vld [vmem:[#allocation5 + $0xd8] sm:$0xf]
      %v1679 = vld [vmem:[#allocation5 + $0xdc] sm:$0xf]
      %v1680 = vld [vmem:[#allocation5 + $0xe0] sm:$0xf]
      %v1681 = vld [vmem:[#allocation5 + $0xe4] sm:$0xf]
      %v1682 = vld [vmem:[#allocation5 + $0xe8] sm:$0xf]
      %v1683 = vld [vmem:[#allocation5 + $0xec] sm:$0xf]
      %v1684 = vld [vmem:[#allocation5 + $0xf0] sm:$0xf]
      %v1685 = vld [vmem:[#allocation5 + $0xf4] sm:$0xf]
      %v1686 = vld [vmem:[#allocation5 + $0xf8] sm:$0xf]
      %v1687 = vld [vmem:[#allocation5 + $0xfc] sm:$0xf]
      %v1688 = vld [vmem:[%s3] sm:$0x1]
      %v1690 = vperm.slane %v1688, 0
      %v1756 = vunpack.c.l.b16 %v1624
      %v1757 = vunpack.c.l.b16 %v1625
      %v1758 = vunpack.c.l.b16 %v1626
      %v1759 = vunpack.c.l.b16 %v1627
      %v1760 = vunpack.c.l.b16 %v1628
      %v1761 = vunpack.c.l.b16 %v1629
      %v1762 = vunpack.c.l.b16 %v1630
      %v1763 = vunpack.c.l.b16 %v1631
      %v1764 = vunpack.c.l.b16 %v1632
      %v1765 = vunpack.c.l.b16 %v1633
      %v1766 = vunpack.c.l.b16 %v1634
      %v1767 = vunpack.c.l.b16 %v1635
      %v1768 = vunpack.c.l.b16 %v1636
      %v1769 = vunpack.c.l.b16 %v1637
      %v1770 = vunpack.c.l.b16 %v1638
      %v1771 = vunpack.c.l.b16 %v1639
      %v1772 = vunpack.c.l.b16 %v1640
      %v1773 = vunpack.c.l.b16 %v1641
      %v1774 = vunpack.c.l.b16 %v1642
      %v1775 = vunpack.c.l.b16 %v1643
      %v1776 = vunpack.c.l.b16 %v1644
      %v1777 = vunpack.c.l.b16 %v1645
      %v1778 = vunpack.c.l.b16 %v1646
      %v1779 = vunpack.c.l.b16 %v1647
      %v1780 = vunpack.c.l.b16 %v1648
      %v1781 = vunpack.c.l.b16 %v1649
      %v1782 = vunpack.c.l.b16 %v1650
      %v1783 = vunpack.c.l.b16 %v1651
      %v1784 = vunpack.c.l.b16 %v1652
      %v1785 = vunpack.c.l.b16 %v1653
      %v1786 = vunpack.c.l.b16 %v1654
      %v1787 = vunpack.c.l.b16 %v1655
      %v1788 = vunpack.c.l.b16 %v1656
      %v1789 = vunpack.c.l.b16 %v1657
      %v1790 = vunpack.c.l.b16 %v1658
      %v1791 = vunpack.c.l.b16 %v1659
      %v1792 = vunpack.c.l.b16 %v1660
      %v1793 = vunpack.c.l.b16 %v1661
      %v1794 = vunpack.c.l.b16 %v1662
      %v1795 = vunpack.c.l.b16 %v1663
      %v1796 = vunpack.c.l.b16 %v1664
      %v1797 = vunpack.c.l.b16 %v1665
      %v1798 = vunpack.c.l.b16 %v1666
      %v1799 = vunpack.c.l.b16 %v1667
      %v1800 = vunpack.c.l.b16 %v1668
      %v1801 = vunpack.c.l.b16 %v1669
      %v1802 = vunpack.c.l.b16 %v1670
      %v1803 = vunpack.c.l.b16 %v1671
      %v1804 = vunpack.c.l.b16 %v1672
      %v1805 = vunpack.c.l.b16 %v1673
      %v1806 = vunpack.c.l.b16 %v1674
      %v1807 = vunpack.c.l.b16 %v1675
      %v1808 = vunpack.c.l.b16 %v1676
      %v1809 = vunpack.c.l.b16 %v1677
      %v1810 = vunpack.c.l.b16 %v1678
      %v1811 = vunpack.c.l.b16 %v1679
      %v1812 = vunpack.c.l.b16 %v1680
      %v1813 = vunpack.c.l.b16 %v1681
      %v1814 = vunpack.c.l.b16 %v1682
      %v1815 = vunpack.c.l.b16 %v1683
      %v1816 = vunpack.c.l.b16 %v1684
      %v1817 = vunpack.c.l.b16 %v1685
      %v1818 = vunpack.c.l.b16 %v1686
      %v1819 = vunpack.c.l.b16 %v1687
      %v1820 = vpack.c.b16 %v1757, %v1756
      %v1821 = vpack.c.b16 %v1759, %v1758
      %v1822 = vpack.c.b16 %v1761, %v1760
      %v1823 = vpack.c.b16 %v1763, %v1762
      %v1824 = vpack.c.b16 %v1765, %v1764
      %v1825 = vpack.c.b16 %v1767, %v1766
      %v1826 = vpack.c.b16 %v1769, %v1768
      %v1827 = vpack.c.b16 %v1771, %v1770
      %v1828 = vpack.c.b16 %v1773, %v1772
      %v1829 = vpack.c.b16 %v1775, %v1774
      %v1830 = vpack.c.b16 %v1777, %v1776
      %v1831 = vpack.c.b16 %v1779, %v1778
      %v1832 = vpack.c.b16 %v1781, %v1780
      %v1833 = vpack.c.b16 %v1783, %v1782
      %v1834 = vpack.c.b16 %v1785, %v1784
      %v1835 = vpack.c.b16 %v1787, %v1786
      %v1836 = vpack.c.b16 %v1789, %v1788
      %v1837 = vpack.c.b16 %v1791, %v1790
      %v1838 = vpack.c.b16 %v1793, %v1792
      %v1839 = vpack.c.b16 %v1795, %v1794
      %v1840 = vpack.c.b16 %v1797, %v1796
      %v1841 = vpack.c.b16 %v1799, %v1798
      %v1842 = vpack.c.b16 %v1801, %v1800
      %v1843 = vpack.c.b16 %v1803, %v1802
      %v1844 = vpack.c.b16 %v1805, %v1804
      %v1845 = vpack.c.b16 %v1807, %v1806
      %v1846 = vpack.c.b16 %v1809, %v1808
      %v1847 = vpack.c.b16 %v1811, %v1810
      %v1848 = vpack.c.b16 %v1813, %v1812
      %v1849 = vpack.c.b16 %v1815, %v1814
      %v1850 = vpack.c.b16 %v1817, %v1816
      %v1851 = vpack.c.b16 %v1819, %v1818
      %1884 = vmatpush.bf16.msra.mxu0 %v1827
      %1885 = vmatpush.bf16.msra.mxu0 %v1826
      %1886 = vmatpush.bf16.msra.mxu0 %v1825
      %1887 = vmatpush.bf16.msra.mxu0 %v1824
      %1888 = vmatpush.bf16.msra.mxu0 %v1823
      %1889 = vmatpush.bf16.msra.mxu0 %v1822
      %1890 = vmatpush.bf16.msra.mxu0 %v1821
      %1891 = vmatpush.bf16.msra.mxu0 %v1820
      %1892 = vmatmul.bf16.gmra.mxu0 %v1620
      %v1893 = vpop.f32.mrf.mxu0
      %v1894 = vadd.f32 %v1690, %v1893
      %v1895 = vpop.f32.mrf.mxu0
      %v1896 = vadd.f32 %v1690, %v1895
      %1897 = vdwg.mxu0
      %1898 = vmatpush.bf16.msra.mxu0 %v1835
      %1899 = vmatpush.bf16.msra.mxu0 %v1834
      %1900 = vmatpush.bf16.msra.mxu0 %v1833
      %1901 = vmatpush.bf16.msra.mxu0 %v1832
      %1902 = vmatpush.bf16.msra.mxu0 %v1831
      %1903 = vmatpush.bf16.msra.mxu0 %v1830
      %1904 = vmatpush.bf16.msra.mxu0 %v1829
      %1905 = vmatpush.bf16.msra.mxu0 %v1828
      %1906 = vmatmul.bf16.gmra.mxu0 %v1621
      %v1907 = vpop.f32.mrf.mxu0
      %v1908 = vadd.f32 %v1894, %v1907
      %v1909 = vpop.f32.mrf.mxu0
      %v1910 = vadd.f32 %v1896, %v1909
      %1911 = vdwg.mxu0
      %1912 = vmatpush.bf16.msra.mxu0 %v1843
      %1913 = vmatpush.bf16.msra.mxu0 %v1842
      %1914 = vmatpush.bf16.msra.mxu0 %v1841
      %1915 = vmatpush.bf16.msra.mxu0 %v1840
      %1916 = vmatpush.bf16.msra.mxu0 %v1839
      %1917 = vmatpush.bf16.msra.mxu0 %v1838
      %1918 = vmatpush.bf16.msra.mxu0 %v1837
      %1919 = vmatpush.bf16.msra.mxu0 %v1836
      %1920 = vmatmul.bf16.gmra.mxu0 %v1622
      %v1921 = vpop.f32.mrf.mxu0
      %v1922 = vadd.f32 %v1908, %v1921
      %v1923 = vpop.f32.mrf.mxu0
      %v1924 = vadd.f32 %v1910, %v1923
      %1925 = vdwg.mxu0
      %1926 = vmatpush.bf16.msra.mxu0 %v1851
      %1927 = vmatpush.bf16.msra.mxu0 %v1850
      %1928 = vmatpush.bf16.msra.mxu0 %v1849
      %1929 = vmatpush.bf16.msra.mxu0 %v1848
      %1930 = vmatpush.bf16.msra.mxu0 %v1847
      %1931 = vmatpush.bf16.msra.mxu0 %v1846
      %1932 = vmatpush.bf16.msra.mxu0 %v1845
      %1933 = vmatpush.bf16.msra.mxu0 %v1844
      %1934 = vmatmul.bf16.gmra.mxu0 %v1623
      %v1935 = vpop.f32.mrf.mxu0
      %v1936 = vadd.f32 %v1922, %v1935
      %v1937 = vpop.f32.mrf.mxu0
      %v1938 = vadd.f32 %v1924, %v1937
      %1939 = vdwg.mxu0
      %1940 = vst [vmem:[%s4] sm:$0xff] %v1936
      %1941 = vst [vmem:[%s4 + $0x8] sm:$0xff] %v1938
    $region33: #{clip_classifier_forward.1} parent=1 // pred_fallthru
      _
    // Predicated region
    $region34: #{clip_classifier_forward.1} parent=1 // pred_check
      _
    $region35: #{clip_classifier_forward.1} parent=1 // pred_check_branch
      %1943 = sbr.rel (0) target = $region37
    $region36: #{clip_classifier_forward.1} parent=1 // pred_region
      _
    $region37: #{clip_classifier_forward.1} parent=1 // pred_fallthru
      _
    // Predicated region
    $region38: #{clip_classifier_forward.1} parent=1 // pred_check
      _
    $region39: #{clip_classifier_forward.1} parent=1 // pred_check_branch
      %1945 = sbr.rel (0) target = $region41
    $region40: #{clip_classifier_forward.1} parent=1 // pred_region
      _
    $region41: #{clip_classifier_forward.1} parent=1 // pred_fallthru
      _
    %1946 = vsyncpa [#allocation4], 1
    %1947 = vsyncpa [#allocation6], 1

</llo_original>
